<compile_context>
chip_gen: v6e
topology: v6e:2x2x1
jax: 0.10.0
libtpu: 0.0.40
codegen_flags: <defaults>
</compile_context>

<pallas_src>
import jax
import jax.numpy as jnp
from jax.experimental import pallas as pl
from jax.experimental.pallas import tpu as pltpu

B1 = 4   # conv1 pooled-row blocks (parallel grid axis)
B2 = 4   # conv2 pooled-row blocks (head-reduction grid axis)


# ---------------------------------------------------------------------------
# Wrapper-side im2col with pool-quadrant lane ordering.
# ---------------------------------------------------------------------------
def _im2col_pool_quadrants(x_nchw, n_blocks, k_pad):
    """3x3 / pad-1 im2col whose lane axis is permuted so the four 2x2-maxpool
    positions of each pooled pixel form contiguous 128-aligned quadrants.

    x_nchw: (N, C, H, W) -> (N, n_blocks, k_pad, 4 * (H//2//n_blocks) * (W//2))
    out[n, b, (ky*3+kx)*C + c, (dy*2+dx)*Lb + phl*(W//2) + pw]
        = x_pad[n, c, (b*Hb + phl)*2 + dy + ky, pw*2 + dx + kx]
    """
    n, c, h, w = x_nchw.shape
    hb = h // 2 // n_blocks                     # pooled rows per block
    wp = w // 2                                 # pooled cols
    xp = jnp.pad(x_nchw, ((0, 0), (0, 0), (1, 1), (1, 1)))
    cols = jnp.stack([xp[:, :, ky:ky + h, kx:kx + w]
                      for ky in range(3) for kx in range(3)], axis=1)   # (N,9,C,H,W)
    cols = cols.reshape(n, 9, c, n_blocks, hb, 2, wp, 2)                # h=(b,phl,dy) w=(pw,dx)
    cols = cols.transpose(0, 3, 1, 2, 5, 7, 4, 6)                       # (N,B,9,C,dy,dx,Hb,Wp)
    cols = cols.reshape(n, n_blocks, 9 * c, 4 * hb * wp)
    if k_pad > 9 * c:
        cols = jnp.pad(cols, ((0, 0), (0, 0), (0, k_pad - 9 * c), (0, 0)))
    return cols.astype(jnp.bfloat16)


# ---------------------------------------------------------------------------
# Kernel 1: Conv2d(3x3, pad 1) + ReLU + MaxPool2d(2), one dot per row-block.
# ---------------------------------------------------------------------------
def _conv_relu_pool_kernel(xcol_ref, w_ref, b_ref, o_ref):
    # xcol_ref: (Kp, 4*Lb) bf16, w_ref: (Cout, Kp) bf16, b_ref: (Cout, 1) f32
    # o_ref: (Cout, Lb)
    lb = o_ref.shape[-1]
    y = jnp.dot(w_ref[...], xcol_ref[...], preferred_element_type=jnp.float32)
    y = jnp.maximum(y + b_ref[...], 0.0)                      # bias + ReLU (f32)
    pooled = jnp.maximum(jnp.maximum(y[:, 0 * lb:1 * lb], y[:, 1 * lb:2 * lb]),
                         jnp.maximum(y[:, 2 * lb:3 * lb], y[:, 3 * lb:4 * lb]))
    o_ref[...] = pooled.astype(o_ref.dtype)                   # lane-dense store


def _conv1(xcol, w, b):
    n, nb, kp, lanes = xcol.shape
    cout = w.shape[0]
    lb = lanes // 4
    return pl.pallas_call(
        _conv_relu_pool_kernel,
        out_shape=jax.ShapeDtypeStruct((n, nb, cout, lb), jnp.bfloat16),
        grid=(n, nb),
        in_specs=[
            pl.BlockSpec((None, None, kp, lanes), lambda i, j: (i, j, 0, 0)),
            pl.BlockSpec((cout, kp), lambda i, j: (0, 0)),
            pl.BlockSpec((cout, 1), lambda i, j: (0, 0)),
        ],
        out_specs=pl.BlockSpec((None, None, cout, lb), lambda i, j: (i, j, 0, 0)),
        compiler_params=pltpu.CompilerParams(
            dimension_semantics=("parallel", "parallel")),
    )(xcol, w, b)


# ---------------------------------------------------------------------------
# Kernel 2: Conv2 + ReLU + MaxPool2 with both linear heads fused; the head
# contraction is accumulated across the "arbitrary" row-block axis so only a
# (3, 1) result per image ever leaves the kernel.
# ---------------------------------------------------------------------------
def _conv_relu_pool_heads_kernel(xcol_ref, w_ref, b_ref, hw_ref, hb_ref, o_ref):
    # xcol_ref: (Kp, 4*Lb) bf16, w_ref: (Cout, Kp) bf16, b_ref: (Cout, 1) f32
    # hw_ref: (3, Cout, Lb) f32, hb_ref: (3, 1) f32, o_ref: (3, 1) f32
    lb = hw_ref.shape[-1]
    y = jnp.dot(w_ref[...], xcol_ref[...], preferred_element_type=jnp.float32)
    y = jnp.maximum(y + b_ref[...], 0.0)
    pooled = jnp.maximum(jnp.maximum(y[:, 0 * lb:1 * lb], y[:, 1 * lb:2 * lb]),
                         jnp.maximum(y[:, 2 * lb:3 * lb], y[:, 3 * lb:4 * lb]))
    part = jnp.sum(hw_ref[...] * pooled[None, :, :], axis=2)   # (3, Cout), lane reduce
    part = jnp.sum(part, axis=1, keepdims=True)                # (3, 1)

    @pl.when(pl.program_id(1) == 0)
    def _():
        o_ref[...] = hb_ref[...]                               # init with head bias
    o_ref[...] += part


def _conv2_heads(xcol, w, b, hw, hb):
    n, nb, kp, lanes = xcol.shape
    cout = w.shape[0]
    lb = lanes // 4
    nh = hw.shape[1]
    return pl.pallas_call(
        _conv_relu_pool_heads_kernel,
        out_shape=jax.ShapeDtypeStruct((n, nh, 1), jnp.float32),
        grid=(n, nb),
        in_specs=[
            pl.BlockSpec((None, None, kp, lanes), lambda i, j: (i, j, 0, 0)),
            pl.BlockSpec((cout, kp), lambda i, j: (0, 0)),
            pl.BlockSpec((cout, 1), lambda i, j: (0, 0)),
            pl.BlockSpec((None, nh, cout, lb), lambda i, j: (j, 0, 0, 0)),
            pl.BlockSpec((nh, 1), lambda i, j: (0, 0)),
        ],
        out_specs=pl.BlockSpec((None, nh, 1), lambda i, j: (i, 0, 0)),
        compiler_params=pltpu.CompilerParams(
            dimension_semantics=("parallel", "arbitrary")),
    )(xcol, w, b, hw, hb)


# ---------------------------------------------------------------------------
# Weight/layout prep (hoisted out of the jitted forward) and the forward pass.
# ---------------------------------------------------------------------------
def prepare_params(params):
    def conv_w(w, k_pad):
        cout, cin = w.shape[0], w.shape[1]
        wk = jnp.transpose(w, (0, 2, 3, 1)).reshape(cout, 9 * cin)   # (Cout, ky*kx*Cin)
        if k_pad > 9 * cin:
            wk = jnp.pad(wk, ((0, 0), (0, k_pad - 9 * cin)))
        return wk.astype(jnp.bfloat16)

    # Heads: PyTorch NCHW flatten order (c*32*32 + ph*32 + pw) -> per-block
    # (block, head, c, ph_local*32 + pw) matching the conv2 kernel's pooled layout.
    w_heads = jnp.concatenate([params["age_w"], params["gender_w"]], axis=0)   # (3, 32768)
    hw = w_heads.reshape(3, 32, B2, 32 // B2, 32).transpose(2, 0, 1, 3, 4)
    hw = hw.reshape(B2, 3, 32, (32 // B2) * 32).astype(jnp.float32)
    hb = jnp.concatenate([params["age_b"], params["gender_b"]]).reshape(3, 1)
    return {
        "w1": conv_w(params["conv1_w"], 32),
        "b1": params["conv1_b"].reshape(-1, 1).astype(jnp.float32),
        "w2": conv_w(params["conv2_w"], 144),
        "b2": params["conv2_b"].reshape(-1, 1).astype(jnp.float32),
        "hw": hw,
        "hb": hb.astype(jnp.float32),
    }


@jax.jit
def age_gender_net(x_nchw, prep):
    n = x_nchw.shape[0]
    # conv1 + ReLU + pool -> (N, B1, 16, (64//B1)*64) bf16, lanes = ph_local*64 + pw
    xcol1 = _im2col_pool_quadrants(x_nchw.astype(jnp.bfloat16), B1, 32)
    h1 = _conv1(xcol1, prep["w1"], prep["b1"])

    # back to spatial (N, 16, 64, 64) for conv2's im2col
    h1 = h1.reshape(n, B1, 16, 64 // B1, 64).transpose(0, 2, 1, 3, 4).reshape(n, 16, 64, 64)

    # conv2 + ReLU + pool + both heads, fused -> (N, 3, 1)
    xcol2 = _im2col_pool_quadrants(h1, B2, 144)
    out = _conv2_heads(xcol2, prep["w2"], prep["b2"], prep["hw"], prep["hb"])
    out = out.reshape(n, 3)
    age = out[:, 0]        # == PyTorch .squeeze() for N > 1 (N == 1 gives 0-d there)
    gender = out[:, 1:]
    return age, gender


# ---------------------------------------------------------------------------
# Pure-JAX reference (numerical self-check only).
# ---------------------------------------------------------------------------
def _reference(x, params):
    hi = jax.lax.Precision.HIGHEST

    def block(y, w, b):
        y = jax.lax.conv_general_dilated(
            y, w, (1, 1), "SAME",
            dimension_numbers=("NCHW", "OIHW", "NCHW"), precision=hi)
        y = jax.nn.relu(y + b[None, :, None, None])
        return jax.lax.reduce_window(y, -jnp.inf, jax.lax.max,
                                     (1, 1, 2, 2), (1, 1, 2, 2), "VALID")

    y = block(block(x, params["conv1_w"], params["conv1_b"]),
              params["conv2_w"], params["conv2_b"])
    f = y.reshape(y.shape[0], -1)
    age = jnp.dot(f, params["age_w"].T, precision=hi) + params["age_b"]
    gender = jnp.dot(f, params["gender_w"].T, precision=hi) + params["gender_b"]
    return age[:, 0], gender


if __name__ == "__main__":
    key = jax.random.PRNGKey(0)
    ks = jax.random.split(key, 8)
    F = 32 * 32 * 32   # fixed by the module's Linear layers -> input must be 3x128x128
    params = {
        "conv1_w": 0.2 * jax.random.normal(ks[0], (16, 3, 3, 3), jnp.float32),
        "conv1_b": 0.1 * jax.random.normal(ks[1], (16,), jnp.float32),
        "conv2_w": 0.1 * jax.random.normal(ks[2], (32, 16, 3, 3), jnp.float32),
        "conv2_b": 0.1 * jax.random.normal(ks[3], (32,), jnp.float32),
        "age_w": 0.01 * jax.random.normal(ks[4], (1, F), jnp.float32),
        "age_b": 0.01 * jax.random.normal(ks[5], (1,), jnp.float32),
        "gender_w": 0.01 * jax.random.normal(ks[6], (2, F), jnp.float32),
        "gender_b": jnp.zeros((2,), jnp.float32),
    }
    # batch = 2 kept small; spatial 128 is forced by Linear(32*32*32) in the module.
    x = jax.random.normal(ks[7], (2, 3, 128, 128), jnp.float32)   # NCHW like PyTorch

    prep = prepare_params(params)            # hoisted layout/weight prep
    age, gender = age_gender_net(x, prep)
    jax.block_until_ready((age, gender))
    assert age.shape == (2,) and gender.shape == (2, 2)
    assert age.dtype == jnp.float32 and gender.dtype == jnp.float32

    age_ref, gender_ref = _reference(x, params)
    err = max(float(jnp.max(jnp.abs(age - age_ref))),
              float(jnp.max(jnp.abs(gender - gender_ref))))
    # bf16 MXU operands through two conv layers: expected |err| ~1e-2 on O(1) outputs.
    assert err < 5e-2, f"numerical mismatch vs reference: {err}"
    print("KERNEL_OK")
</pallas_src>

<mosaic_0001>
module attributes {stable_mosaic.version = 11 : i64} {
  func.func @_conv_relu_pool_kernel(%arg0: i32, %arg1: i32, %arg2: memref<1x1x32x4096xbf16, #tpu.memory_space<vmem>>, %arg3: memref<16x32xbf16, #tpu.memory_space<vmem>>, %arg4: memref<16x1xf32, #tpu.memory_space<vmem>>, %arg5: memref<1x1x16x1024xbf16, #tpu.memory_space<vmem>>) attributes {dimension_semantics = [#tpu.dimension_semantics<parallel>, #tpu.dimension_semantics<parallel>], iteration_bounds = array<i64: 2, 4>, scalar_prefetch = 0 : i64, scratch_operands = 0 : i64, tpu.core_type = #tpu.core_type<tc>, window_params = [{transform_indices = @transform_0, window_bounds = array<i64: 1, 1, 32, 4096>}, {pipeline_mode = #tpu.pipeline_mode<synchronous>, transform_indices = @transform_1, window_bounds = array<i64: 16, 32>}, {pipeline_mode = #tpu.pipeline_mode<synchronous>, transform_indices = @transform_2, window_bounds = array<i64: 16, 1>}, {transform_indices = @transform_3, window_bounds = array<i64: 1, 1, 16, 1024>}]} {
    %c0 = arith.constant 0 : index
    %c0_0 = arith.constant 0 : index
    %0 = vector.load %arg3[%c0, %c0_0] : memref<16x32xbf16, #tpu.memory_space<vmem>>, vector<16x32xbf16>
    %c0_1 = arith.constant 0 : index
    %c0_2 = arith.constant 0 : index
    %c0_3 = arith.constant 0 : index
    %c0_4 = arith.constant 0 : index
    %1 = vector.load %arg2[%c0_1, %c0_2, %c0_3, %c0_4] : memref<1x1x32x4096xbf16, #tpu.memory_space<vmem>>, vector<1x1x32x4096xbf16>
    %2 = vector.shape_cast %1 : vector<1x1x32x4096xbf16> to vector<32x4096xbf16>
    %cst = arith.constant dense<0.000000e+00> : vector<16x4096xf32>
    %3 = tpu.matmul %0, %2, %cst {dimension_numbers = #tpu.dot_dimension_numbers<[1], [0], [0], [1], [0, 0, 1, 1], [], []>} : vector<16x32xbf16>, vector<32x4096xbf16>, vector<16x4096xf32> -> vector<16x4096xf32>
    %c0_5 = arith.constant 0 : index
    %c0_6 = arith.constant 0 : index
    %4 = vector.load %arg4[%c0_5, %c0_6] : memref<16x1xf32, #tpu.memory_space<vmem>>, vector<16x1xf32>
    %5 = vector.broadcast %4 : vector<16x1xf32> to vector<16x4096xf32>
    %6 = arith.addf %3, %5 : vector<16x4096xf32>
    %cst_7 = arith.constant 0.000000e+00 : f32
    %7 = vector.broadcast %cst_7 : f32 to vector<16x4096xf32>
    %8 = arith.maximumf %6, %7 : vector<16x4096xf32>
    %9 = vector.extract_strided_slice %8 {offsets = [0, 0], sizes = [16, 1024], strides = [1, 1]} : vector<16x4096xf32> to vector<16x1024xf32>
    %10 = vector.extract_strided_slice %8 {offsets = [0, 1024], sizes = [16, 1024], strides = [1, 1]} : vector<16x4096xf32> to vector<16x1024xf32>
    %11 = arith.maximumf %9, %10 : vector<16x1024xf32>
    %12 = vector.extract_strided_slice %8 {offsets = [0, 2048], sizes = [16, 1024], strides = [1, 1]} : vector<16x4096xf32> to vector<16x1024xf32>
    %13 = vector.extract_strided_slice %8 {offsets = [0, 3072], sizes = [16, 1024], strides = [1, 1]} : vector<16x4096xf32> to vector<16x1024xf32>
    %14 = arith.maximumf %12, %13 : vector<16x1024xf32>
    %15 = arith.maximumf %11, %14 : vector<16x1024xf32>
    %16 = arith.truncf %15 : vector<16x1024xf32> to vector<16x1024xbf16>
    %c0_8 = arith.constant 0 : index
    %c0_9 = arith.constant 0 : index
    %c0_10 = arith.constant 0 : index
    %c0_11 = arith.constant 0 : index
    %17 = vector.load %arg5[%c0_8, %c0_9, %c0_10, %c0_11] : memref<1x1x16x1024xbf16, #tpu.memory_space<vmem>>, vector<1x1x16x1024xbf16>
    %18 = vector.shape_cast %17 : vector<1x1x16x1024xbf16> to vector<16x1024xbf16>
    %19 = vector.shape_cast %16 : vector<16x1024xbf16> to vector<1x1x16x1024xbf16>
    tpu.vector_store %arg5[%c0_8, %c0_9, %c0_10, %c0_11], %19 {strides = array<i32>} : memref<1x1x16x1024xbf16, #tpu.memory_space<vmem>>, vector<1x1x16x1024xbf16>,
    return
  }
  func.func @transform_0(%arg0: i32, %arg1: i32) -> (i32, i32, i32, i32) {
    %c0_i32 = arith.constant 0 : i32
    %c0_i32_0 = arith.constant 0 : i32
    %c0_i32_1 = arith.constant 0 : i32
    return %arg0, %arg1, %c0_i32, %c0_i32_0 : i32, i32, i32, i32
  }
  func.func @transform_1(%arg0: i32, %arg1: i32) -> (i32, i32) {
    %c0_i32 = arith.constant 0 : i32
    %c0_i32_0 = arith.constant 0 : i32
    %c0_i32_1 = arith.constant 0 : i32
    return %c0_i32, %c0_i32_0 : i32, i32
  }
  func.func @transform_2(%arg0: i32, %arg1: i32) -> (i32, i32) {
    %c0_i32 = arith.constant 0 : i32
    %c0_i32_0 = arith.constant 0 : i32
    %c0_i32_1 = arith.constant 0 : i32
    return %c0_i32, %c0_i32_0 : i32, i32
  }
  func.func @transform_3(%arg0: i32, %arg1: i32) -> (i32, i32, i32, i32) {
    %c0_i32 = arith.constant 0 : i32
    %c0_i32_0 = arith.constant 0 : i32
    %c0_i32_1 = arith.constant 0 : i32
    return %arg0, %arg1, %c0_i32, %c0_i32_0 : i32, i32, i32, i32
  }
}

module attributes {stable_mosaic.version = 11 : i64} {
  func.func @_conv_relu_pool_heads_kernel(%arg0: i32, %arg1: i32, %arg2: memref<1x1x144x1024xbf16, #tpu.memory_space<vmem>>, %arg3: memref<32x144xbf16, #tpu.memory_space<vmem>>, %arg4: memref<32x1xf32, #tpu.memory_space<vmem>>, %arg5: memref<1x3x32x256xf32, #tpu.memory_space<vmem>>, %arg6: memref<3x1xf32, #tpu.memory_space<vmem>>, %arg7: memref<1x3x1xf32, #tpu.memory_space<vmem>>) attributes {dimension_semantics = [#tpu.dimension_semantics<parallel>, #tpu.dimension_semantics<arbitrary>], iteration_bounds = array<i64: 2, 4>, scalar_prefetch = 0 : i64, scratch_operands = 0 : i64, tpu.core_type = #tpu.core_type<tc>, window_params = [{transform_indices = @transform_0, window_bounds = array<i64: 1, 1, 144, 1024>}, {pipeline_mode = #tpu.pipeline_mode<synchronous>, transform_indices = @transform_1, window_bounds = array<i64: 32, 144>}, {pipeline_mode = #tpu.pipeline_mode<synchronous>, transform_indices = @transform_2, window_bounds = array<i64: 32, 1>}, {transform_indices = @transform_3, window_bounds = array<i64: 1, 3, 32, 256>}, {pipeline_mode = #tpu.pipeline_mode<synchronous>, transform_indices = @transform_4, window_bounds = array<i64: 3, 1>}, {transform_indices = @transform_5, window_bounds = array<i64: 1, 3, 1>}]} {
    %c0 = arith.constant 0 : index
    %c0_0 = arith.constant 0 : index
    %0 = vector.load %arg3[%c0, %c0_0] : memref<32x144xbf16, #tpu.memory_space<vmem>>, vector<32x144xbf16>
    %c0_1 = arith.constant 0 : index
    %c0_2 = arith.constant 0 : index
    %c0_3 = arith.constant 0 : index
    %c0_4 = arith.constant 0 : index
    %1 = vector.load %arg2[%c0_1, %c0_2, %c0_3, %c0_4] : memref<1x1x144x1024xbf16, #tpu.memory_space<vmem>>, vector<1x1x144x1024xbf16>
    %2 = vector.shape_cast %1 : vector<1x1x144x1024xbf16> to vector<144x1024xbf16>
    %cst = arith.constant dense<0.000000e+00> : vector<32x1024xf32>
    %3 = tpu.matmul %0, %2, %cst {dimension_numbers = #tpu.dot_dimension_numbers<[1], [0], [0], [1], [0, 0, 1, 1], [], []>} : vector<32x144xbf16>, vector<144x1024xbf16>, vector<32x1024xf32> -> vector<32x1024xf32>
    %c0_5 = arith.constant 0 : index
    %c0_6 = arith.constant 0 : index
    %4 = vector.load %arg4[%c0_5, %c0_6] : memref<32x1xf32, #tpu.memory_space<vmem>>, vector<32x1xf32>
    %5 = vector.broadcast %4 : vector<32x1xf32> to vector<32x1024xf32>
    %6 = arith.addf %3, %5 : vector<32x1024xf32>
    %cst_7 = arith.constant 0.000000e+00 : f32
    %7 = vector.broadcast %cst_7 : f32 to vector<32x1024xf32>
    %8 = arith.maximumf %6, %7 : vector<32x1024xf32>
    %9 = vector.extract_strided_slice %8 {offsets = [0, 0], sizes = [32, 256], strides = [1, 1]} : vector<32x1024xf32> to vector<32x256xf32>
    %10 = vector.extract_strided_slice %8 {offsets = [0, 256], sizes = [32, 256], strides = [1, 1]} : vector<32x1024xf32> to vector<32x256xf32>
    %11 = arith.maximumf %9, %10 : vector<32x256xf32>
    %12 = vector.extract_strided_slice %8 {offsets = [0, 512], sizes = [32, 256], strides = [1, 1]} : vector<32x1024xf32> to vector<32x256xf32>
    %13 = vector.extract_strided_slice %8 {offsets = [0, 768], sizes = [32, 256], strides = [1, 1]} : vector<32x1024xf32> to vector<32x256xf32>
    %14 = arith.maximumf %12, %13 : vector<32x256xf32>
    %15 = arith.maximumf %11, %14 : vector<32x256xf32>
    %c0_8 = arith.constant 0 : index
    %c0_9 = arith.constant 0 : index
    %c0_10 = arith.constant 0 : index
    %c0_11 = arith.constant 0 : index
    %16 = vector.load %arg5[%c0_8, %c0_9, %c0_10, %c0_11] : memref<1x3x32x256xf32, #tpu.memory_space<vmem>>, vector<1x3x32x256xf32>
    %17 = vector.shape_cast %16 : vector<1x3x32x256xf32> to vector<3x32x256xf32>
    %18 = vector.shape_cast %15 : vector<32x256xf32> to vector<1x32x256xf32>
    %19 = vector.broadcast %18 : vector<1x32x256xf32> to vector<3x32x256xf32>
    %20 = arith.mulf %17, %19 : vector<3x32x256xf32>
    %cst_12 = arith.constant dense<0.000000e+00> : vector<3x32xf32>
    %21 = vector.multi_reduction <add>, %20, %cst_12 [2] : vector<3x32x256xf32> to vector<3x32xf32>
    %cst_13 = arith.constant dense<0.000000e+00> : vector<3xf32>
    %22 = vector.multi_reduction <add>, %21, %cst_13 [1] : vector<3x32xf32> to vector<3xf32>
    %23 = vector.shape_cast %22 : vector<3xf32> to vector<3x1xf32>
    %c0_i32 = arith.constant 0 : i32
    %24 = arith.cmpi eq, %arg1, %c0_i32 : i32
    %25 = arith.extui %24 : i1 to i32
    %c0_i32_14 = arith.constant 0 : i32
    %26 = arith.cmpi ne, %25, %c0_i32_14 : i32
    scf.if %26 {
      %c0_21 = arith.constant 0 : index
      %c0_22 = arith.constant 0 : index
      %33 = vector.load %arg6[%c0_21, %c0_22] : memref<3x1xf32, #tpu.memory_space<vmem>>, vector<3x1xf32>
      %c0_23 = arith.constant 0 : index
      %c0_24 = arith.constant 0 : index
      %c0_25 = arith.constant 0 : index
      %34 = vector.load %arg7[%c0_23, %c0_24, %c0_25] : memref<1x3x1xf32, #tpu.memory_space<vmem>>, vector<1x3x1xf32>
      %35 = vector.shape_cast %34 : vector<1x3x1xf32> to vector<3x1xf32>
      %36 = vector.shape_cast %33 : vector<3x1xf32> to vector<1x3x1xf32>
      tpu.vector_store %arg7[%c0_23, %c0_24, %c0_25], %36 {strides = array<i32>} : memref<1x3x1xf32, #tpu.memory_space<vmem>>, vector<1x3x1xf32>,
    } else {
    }
    %c0_15 = arith.constant 0 : index
    %c0_16 = arith.constant 0 : index
    %c0_17 = arith.constant 0 : index
    %27 = vector.load %arg7[%c0_15, %c0_16, %c0_17] : memref<1x3x1xf32, #tpu.memory_space<vmem>>, vector<1x3x1xf32>
    %28 = vector.shape_cast %27 : vector<1x3x1xf32> to vector<3x1xf32>
    %29 = arith.addf %28, %23 : vector<3x1xf32>
    %c0_18 = arith.constant 0 : index
    %c0_19 = arith.constant 0 : index
    %c0_20 = arith.constant 0 : index
    %30 = vector.load %arg7[%c0_18, %c0_19, %c0_20] : memref<1x3x1xf32, #tpu.memory_space<vmem>>, vector<1x3x1xf32>
    %31 = vector.shape_cast %30 : vector<1x3x1xf32> to vector<3x1xf32>
    %32 = vector.shape_cast %29 : vector<3x1xf32> to vector<1x3x1xf32>
    tpu.vector_store %arg7[%c0_18, %c0_19, %c0_20], %32 {strides = array<i32>} : memref<1x3x1xf32, #tpu.memory_space<vmem>>, vector<1x3x1xf32>,
    return
  }
  func.func @transform_0(%arg0: i32, %arg1: i32) -> (i32, i32, i32, i32) {
    %c0_i32 = arith.constant 0 : i32
    %c0_i32_0 = arith.constant 0 : i32
    %c0_i32_1 = arith.constant 0 : i32
    return %arg0, %arg1, %c0_i32, %c0_i32_0 : i32, i32, i32, i32
  }
  func.func @transform_1(%arg0: i32, %arg1: i32) -> (i32, i32) {
    %c0_i32 = arith.constant 0 : i32
    %c0_i32_0 = arith.constant 0 : i32
    %c0_i32_1 = arith.constant 0 : i32
    return %c0_i32, %c0_i32_0 : i32, i32
  }
  func.func @transform_2(%arg0: i32, %arg1: i32) -> (i32, i32) {
    %c0_i32 = arith.constant 0 : i32
    %c0_i32_0 = arith.constant 0 : i32
    %c0_i32_1 = arith.constant 0 : i32
    return %c0_i32, %c0_i32_0 : i32, i32
  }
  func.func @transform_3(%arg0: i32, %arg1: i32) -> (i32, i32, i32, i32) {
    %c0_i32 = arith.constant 0 : i32
    %c0_i32_0 = arith.constant 0 : i32
    %c0_i32_1 = arith.constant 0 : i32
    %c0_i32_2 = arith.constant 0 : i32
    return %arg1, %c0_i32, %c0_i32_0, %c0_i32_1 : i32, i32, i32, i32
  }
  func.func @transform_4(%arg0: i32, %arg1: i32) -> (i32, i32) {
    %c0_i32 = arith.constant 0 : i32
    %c0_i32_0 = arith.constant 0 : i32
    %c0_i32_1 = arith.constant 0 : i32
    return %c0_i32, %c0_i32_0 : i32, i32
  }
  func.func @transform_5(%arg0: i32, %arg1: i32) -> (i32, i32, i32) {
    %c0_i32 = arith.constant 0 : i32
    %c0_i32_0 = arith.constant 0 : i32
    %c0_i32_1 = arith.constant 0 : i32
    return %arg0, %c0_i32, %c0_i32_0 : i32, i32, i32
  }
}

</mosaic_0001>

<llo_original>
// kernel: age_gender_net.2
$region0: #{age_gender_net.2}
  #allocation0 [shape = 'u32[]', space=smem, size = 0x4, offset = 0x4, fixed_abs, tag = 'smem constant byte address 0x4 - core index']
  #allocation1 [shape = 'u32[144,128]{1,0:T(1,128)}', space=vmem, size = 0x12000, scoped, tag = 'internal scratch']
  %s0 = inlined_call_operand.vmem [shape: bf16[2,4,32,4096], index: 0, kind: input, shape index: {}]
  %s1 = inlined_call_operand.vmem [shape: bf16[16,32], index: 1, kind: input, shape index: {}]
  %s2 = inlined_call_operand.vmem [shape: f32[16,1], index: 2, kind: input, shape index: {}]
  %s3 = inlined_call_operand.vmem [shape: bf16[2,4,16,1024], index: 3, kind: output, shape index: {}]
  %s4 = sld [smem:[#allocation0]]
  $region45: #{age_gender_net.2} parent=0
    _
  %s6 = ssub.s32 1, %s4
  %s7 = scalar_select 0, %s6, %s4
  loop: start=0, step=1, limit=10
  $region2: #{age_gender_net.2} parent=0 // loop_pre_header
    _
  $region3: #{age_gender_net.2} parent=0 // loop_header
    %s9 = sphi 0, %s13
    %p10 = scmp.ge.s32.totalorder %s9, 10
    %s16 = sphi 0, %s28
    %s17 = sphi 0, %s24
    %s18 = sphi 0, %s16
    %s19 = sphi 0, %s17
    %s20 = sphi 0, %s18
    %s21 = sphi 0, %s19
    %s33 = sphi 0, %s35
    %s36 = sphi 0, %s33
    %s37 = sphi 0, %s36
    %s53 = sphi 0, %s37
    %s57 = sphi 0, %s57
    %s59 = sphi 0, %s57
    %s60 = sphi 0, %s59
    %s74 = sphi 0, %s60
    %s78 = sphi 0, %s78
    %s80 = sphi 0, %s78
    %s81 = sphi 0, %s80
    %s95 = sphi 0, %s81
    %s103 = sphi 0, %s105
    %s106 = sphi 0, %s103
    %s107 = sphi 0, %s106
    %s123 = sphi 0, %s107
  $region4: #{age_gender_net.2} parent=0 // loop_header_branch
    %12 = sbr.rel (%p10) target = $region8
  $region5: #{age_gender_net.2} parent=0 // loop_body
    %s14 = ssub.s32 %s9, 1
    %s15 = ssub.s32 %s9, 2
    %s22 = sadd.s32 1, %s17
    %p23 = scmp.ge.s32.totalorder %s22, 4
    %s24 = scalar_select %p23, 0, %s22
    %s25 = sadd.s32 1, %s16
    %s26 = scalar_select %p23, %s25, %s16
    %p27 = scmp.ge.s32.totalorder %s26, 2
    %s28 = scalar_select %p27, 0, %s26
    %s29 = ssub.s32 %s16, %s28
    %s30 = ssub.s32 %s17, %s24
    %s31 = sor.u32 %s29, %s30
    %p32 = scmp.eq.s32.totalorder %s31, 0
    %s34 = sadd.s32 %s33, 1
    %s35 = scalar_select %p32, %s33, %s34
    %p38 = pneg %p32
    %p39 = scmp.eq.s32.totalorder %s9, 7
    %p40 = por %p38, %p39
    %p41 = scmp.ne.s32.totalorder %s33, %s36
    %p42 = scmp.eq.s32.totalorder %s9, 0
    %p43 = por %p41, %p42
    %p44 = scmp.ne.s32.totalorder %s33, %s36
    %p45 = scmp.eq.s32.totalorder %s14, 7
    %p46 = por %p44, %p45
    %p47 = scmp.ne.s32.totalorder %s36, %s37
    %p48 = scmp.eq.s32.totalorder %s14, 0
    %p49 = por %p47, %p48
    %p50 = scmp.ne.s32.totalorder %s36, %s37
    %p51 = scmp.eq.s32.totalorder %s15, 7
    %p52 = por %p50, %p51
    %p54 = scmp.ne.s32.totalorder %s37, %s53
    %p55 = scmp.eq.s32.totalorder %s15, 0
    %p56 = por %p54, %p55
    %s58 = sadd.s32 %s57, 1
    %p61 = scmp.eq.s32.totalorder %s9, 7
    %p62 = scmp.ne.s32.totalorder %s57, %s59
    %p63 = scmp.eq.s32.totalorder %s9, 0
    %p64 = por %p62, %p63
    %p65 = scmp.ne.s32.totalorder %s57, %s59
    %p66 = scmp.eq.s32.totalorder %s14, 7
    %p67 = por %p65, %p66
    %p68 = scmp.ne.s32.totalorder %s59, %s60
    %p69 = scmp.eq.s32.totalorder %s14, 0
    %p70 = por %p68, %p69
    %p71 = scmp.ne.s32.totalorder %s59, %s60
    %p72 = scmp.eq.s32.totalorder %s15, 7
    %p73 = por %p71, %p72
    %p75 = scmp.ne.s32.totalorder %s60, %s74
    %p76 = scmp.eq.s32.totalorder %s15, 0
    %p77 = por %p75, %p76
    %s79 = sadd.s32 %s78, 1
    %p82 = scmp.eq.s32.totalorder %s9, 7
    %p83 = scmp.ne.s32.totalorder %s78, %s80
    %p84 = scmp.eq.s32.totalorder %s9, 0
    %p85 = por %p83, %p84
    %p86 = scmp.ne.s32.totalorder %s78, %s80
    %p87 = scmp.eq.s32.totalorder %s14, 7
    %p88 = por %p86, %p87
    %p89 = scmp.ne.s32.totalorder %s80, %s81
    %p90 = scmp.eq.s32.totalorder %s14, 0
    %p91 = por %p89, %p90
    %p92 = scmp.ne.s32.totalorder %s80, %s81
    %p93 = scmp.eq.s32.totalorder %s15, 7
    %p94 = por %p92, %p93
    %p96 = scmp.ne.s32.totalorder %s81, %s95
    %p97 = scmp.eq.s32.totalorder %s15, 0
    %p98 = por %p96, %p97
    %s99 = ssub.s32 %s16, %s28
    %s100 = ssub.s32 %s17, %s24
    %s101 = sor.u32 %s99, %s100
    %p102 = scmp.eq.s32.totalorder %s101, 0
    %s104 = sadd.s32 %s103, 1
    %s105 = scalar_select %p102, %s103, %s104
    %p108 = pneg %p102
    %p109 = scmp.eq.s32.totalorder %s9, 7
    %p110 = por %p108, %p109
    %p111 = scmp.ne.s32.totalorder %s103, %s106
    %p112 = scmp.eq.s32.totalorder %s9, 0
    %p113 = por %p111, %p112
    %p114 = scmp.ne.s32.totalorder %s103, %s106
    %p115 = scmp.eq.s32.totalorder %s14, 7
    %p116 = por %p114, %p115
    %p117 = scmp.ne.s32.totalorder %s106, %s107
    %p118 = scmp.eq.s32.totalorder %s14, 0
    %p119 = por %p117, %p118
    %p120 = scmp.ne.s32.totalorder %s106, %s107
    %p121 = scmp.eq.s32.totalorder %s15, 7
    %p122 = por %p120, %p121
    %p124 = scmp.ne.s32.totalorder %s107, %s123
    %p125 = scmp.eq.s32.totalorder %s15, 0
    %p126 = por %p124, %p125
    %p127 = scmp.le.s32.totalorder 1, %s9
    %p128 = scmp.lt.s32.totalorder %s9, 9
    %p129 = pnand %p127, %p128
    %p130 = pneg %p129
    // Predicated region
    $region9: #{age_gender_net.2} parent=5 // pred_check
      _
    $region10: #{age_gender_net.2} parent=5 // pred_check_branch
      %132 = sbr.rel (%p129) target = $region12
    $region11: #{age_gender_net.2} parent=5 // pred_region
      %s133 = ssub.s32 %s9, 1
      // Predicated region
      $region13: #{age_gender_net.2} parent=11 // pred_check
        %p134 = pneg %p70
      $region14: #{age_gender_net.2} parent=11 // pred_check_branch
        %136 = sbr.rel (%p134) target = $region16
      $region15: #{age_gender_net.2} parent=11 // pred_region
        _
      $region16: #{age_gender_net.2} parent=11 // pred_fallthru
        _
      // Predicated region
      $region17: #{age_gender_net.2} parent=11 // pred_check
        %p137 = pneg %p91
      $region18: #{age_gender_net.2} parent=11 // pred_check_branch
        %139 = sbr.rel (%p137) target = $region20
      $region19: #{age_gender_net.2} parent=11 // pred_region
        _
      $region20: #{age_gender_net.2} parent=11 // pred_fallthru
        _
    $region12: #{age_gender_net.2} parent=5 // pred_fallthru
      _
    %p140 = scmp.lt.s32.totalorder %s9, 8
    // Predicated region
    $region21: #{age_gender_net.2} parent=5 // pred_check
      %p141 = pneg %p140
    $region22: #{age_gender_net.2} parent=5 // pred_check_branch
      %143 = sbr.rel (%p141) target = $region24
    $region23: #{age_gender_net.2} parent=5 // pred_region
      // Predicated region
      $region25: #{age_gender_net.2} parent=23 // pred_check
        %p144 = pneg %p43
      $region26: #{age_gender_net.2} parent=23 // pred_check_branch
        %146 = sbr.rel (%p144) target = $region28
      $region27: #{age_gender_net.2} parent=23 // pred_region
        %p147 = scmp.lt.s32.totalorder %s16, 1
        %s148 = scalar_select %p147, %s16, 1
        %p149 = scmp.lt.s32.totalorder %s17, 3
        %s150 = scalar_select %p149, %s17, 3
        %s151 = smul.addr %s150, 128
        %s152 = smul.addr %s148, 512
        %s153 = sadd.s32 %s151, %s152
        %s154 = smul.addr %s153, 4
        %s155 = scalar_lea.vmem %s0, %s154
      $region28: #{age_gender_net.2} parent=23 // pred_fallthru
        _
    $region24: #{age_gender_net.2} parent=5 // pred_fallthru
      _
    %p156 = scmp.le.s32.totalorder 1, %s9
    %p157 = scmp.lt.s32.totalorder %s9, 9
    %p158 = pnand %p156, %p157
    %p159 = pneg %p158
    // Predicated region
    $region29: #{age_gender_net.2} parent=5 // pred_check
      _
    $region30: #{age_gender_net.2} parent=5 // pred_check_branch
      %161 = sbr.rel (%p158) target = $region32
    $region31: #{age_gender_net.2} parent=5 // pred_region
      %s162 = ssub.s32 %s9, 1
      %p163 = scmp.lt.s32.totalorder %s18, 1
      %s164 = scalar_select %p163, %s18, 1
      %p165 = scmp.lt.s32.totalorder %s19, 3
      %s166 = scalar_select %p165, %s19, 3
      %s167 = smul.addr %s166, 128
      %s168 = smul.addr %s164, 512
      %s169 = sadd.s32 %s167, %s168
      %s170 = smul.addr %s169, 4
      %s171 = scalar_lea.vmem %s0, %s170
      %p172 = pneg %p49
      %p173 = pneg %p46
      %p174 = pneg %p70
      %p175 = pneg %p67
      %p176 = pneg %p91
      %p177 = pneg %p88
      %p178 = pneg %p119
      %p179 = pneg %p116
      %p180 = scmp.lt.s32.totalorder %s18, 1
      %s181 = scalar_select %p180, %s18, 1
      %p182 = scmp.lt.s32.totalorder %s19, 3
      %s183 = scalar_select %p182, %s19, 3
      %s184 = smul.addr %s183, 16
      %s185 = smul.addr %s181, 64
      %s186 = sadd.s32 %s184, %s185
      %s187 = smul.addr %s186, 4
      %s188 = scalar_lea.vmem %s3, %s187
      %p189 = scmp.lt.s32.totalorder %s18, 1
      %s190 = scalar_select %p189, %s18, 1
      %p191 = scmp.lt.s32.totalorder %s19, 3
      %s192 = scalar_select %p191, %s19, 3
      %s193 = smul.addr %s192, 128
      %s194 = smul.addr %s190, 512
      %s195 = sadd.s32 %s193, %s194
      %s196 = smul.addr %s195, 4
      %s197 = scalar_lea.vmem %s0, %s196
      %p198 = scmp.lt.s32.totalorder %s18, 1
      %s199 = scalar_select %p198, %s18, 1
      %p200 = scmp.lt.s32.totalorder %s19, 3
      %s201 = scalar_select %p200, %s19, 3
      %s202 = smul.addr %s201, 16
      %s203 = smul.addr %s199, 64
      %s204 = sadd.s32 %s202, %s203
      %s205 = smul.addr %s204, 4
      %s206 = scalar_lea.vmem %s3, %s205
      %v208 = vld [vmem:[%s1] sm:$0xf]
      %v209 = vld [vmem:[%s1 + $0x4] sm:$0xf]
      %v210 = vld [vmem:[%s197] sm:$0xff]
      %v211 = vld [vmem:[%s197 + $0x8] sm:$0xff]
      %v212 = vld [vmem:[%s197 + $0x10] sm:$0xff]
      %v213 = vld [vmem:[%s197 + $0x18] sm:$0xff]
      %v214 = vld [vmem:[%s197 + $0x20] sm:$0xff]
      %v215 = vld [vmem:[%s197 + $0x28] sm:$0xff]
      %v216 = vld [vmem:[%s197 + $0x30] sm:$0xff]
      %v217 = vld [vmem:[%s197 + $0x38] sm:$0xff]
      %v218 = vld [vmem:[%s197 + $0x40] sm:$0xff]
      %v219 = vld [vmem:[%s197 + $0x48] sm:$0xff]
      %v220 = vld [vmem:[%s197 + $0x50] sm:$0xff]
      %v221 = vld [vmem:[%s197 + $0x58] sm:$0xff]
      %v222 = vld [vmem:[%s197 + $0x60] sm:$0xff]
      %v223 = vld [vmem:[%s197 + $0x68] sm:$0xff]
      %v224 = vld [vmem:[%s197 + $0x70] sm:$0xff]
      %v225 = vld [vmem:[%s197 + $0x78] sm:$0xff]
      %v226 = vld [vmem:[%s197 + $0x80] sm:$0xff]
      %v227 = vld [vmem:[%s197 + $0x88] sm:$0xff]
      %v228 = vld [vmem:[%s197 + $0x90] sm:$0xff]
      %v229 = vld [vmem:[%s197 + $0x98] sm:$0xff]
      %v230 = vld [vmem:[%s197 + $0xa0] sm:$0xff]
      %v231 = vld [vmem:[%s197 + $0xa8] sm:$0xff]
      %v232 = vld [vmem:[%s197 + $0xb0] sm:$0xff]
      %v233 = vld [vmem:[%s197 + $0xb8] sm:$0xff]
      %v234 = vld [vmem:[%s197 + $0xc0] sm:$0xff]
      %v235 = vld [vmem:[%s197 + $0xc8] sm:$0xff]
      %v236 = vld [vmem:[%s197 + $0xd0] sm:$0xff]
      %v237 = vld [vmem:[%s197 + $0xd8] sm:$0xff]
      %v238 = vld [vmem:[%s197 + $0xe0] sm:$0xff]
      %v239 = vld [vmem:[%s197 + $0xe8] sm:$0xff]
      %v240 = vld [vmem:[%s197 + $0xf0] sm:$0xff]
      %v241 = vld [vmem:[%s197 + $0xf8] sm:$0xff]
      %v242 = vld [vmem:[%s197 + $0x100] sm:$0xff]
      %v243 = vld [vmem:[%s197 + $0x108] sm:$0xff]
      %v244 = vld [vmem:[%s197 + $0x110] sm:$0xff]
      %v245 = vld [vmem:[%s197 + $0x118] sm:$0xff]
      %v246 = vld [vmem:[%s197 + $0x120] sm:$0xff]
      %v247 = vld [vmem:[%s197 + $0x128] sm:$0xff]
      %v248 = vld [vmem:[%s197 + $0x130] sm:$0xff]
      %v249 = vld [vmem:[%s197 + $0x138] sm:$0xff]
      %v250 = vld [vmem:[%s197 + $0x140] sm:$0xff]
      %v251 = vld [vmem:[%s197 + $0x148] sm:$0xff]
      %v252 = vld [vmem:[%s197 + $0x150] sm:$0xff]
      %v253 = vld [vmem:[%s197 + $0x158] sm:$0xff]
      %v254 = vld [vmem:[%s197 + $0x160] sm:$0xff]
      %v255 = vld [vmem:[%s197 + $0x168] sm:$0xff]
      %v256 = vld [vmem:[%s197 + $0x170] sm:$0xff]
      %v257 = vld [vmem:[%s197 + $0x178] sm:$0xff]
      %v258 = vld [vmem:[%s197 + $0x180] sm:$0xff]
      %v259 = vld [vmem:[%s197 + $0x188] sm:$0xff]
      %v260 = vld [vmem:[%s197 + $0x190] sm:$0xff]
      %v261 = vld [vmem:[%s197 + $0x198] sm:$0xff]
      %v262 = vld [vmem:[%s197 + $0x1a0] sm:$0xff]
      %v263 = vld [vmem:[%s197 + $0x1a8] sm:$0xff]
      %v264 = vld [vmem:[%s197 + $0x1b0] sm:$0xff]
      %v265 = vld [vmem:[%s197 + $0x1b8] sm:$0xff]
      %v266 = vld [vmem:[%s197 + $0x1c0] sm:$0xff]
      %v267 = vld [vmem:[%s197 + $0x1c8] sm:$0xff]
      %v268 = vld [vmem:[%s197 + $0x1d0] sm:$0xff]
      %v269 = vld [vmem:[%s197 + $0x1d8] sm:$0xff]
      %v270 = vld [vmem:[%s197 + $0x1e0] sm:$0xff]
      %v271 = vld [vmem:[%s197 + $0x1e8] sm:$0xff]
      %v272 = vld [vmem:[%s197 + $0x1f0] sm:$0xff]
      %v273 = vld [vmem:[%s197 + $0x1f8] sm:$0xff]
      %v274 = vld [vmem:[%s2] sm:$0xff]
      %v275 = vld [vmem:[%s2 + $0x8] sm:$0xff]
      %277 = vset.pattern.permute.xlu0 0
      %278 = vperm.xlu0 %277, %v274
      %v279 = vpop.permute.xlu0 %278
      %282 = vset.pattern.permute.xlu0 0
      %283 = vperm.xlu0 %282, %v275
      %v284 = vpop.permute.xlu0 %283
      %v288 = vunpack.c.l.b16 %v208
      %v289 = vunpack.c.l.b16 %v209
      %v290 = vpack.c.b16 %v289, %v288
      %v355 = vunpack.c.l.b16 %v210
      %v356 = vunpack.c.h.b16 %v210
      %v357 = vunpack.c.l.b16 %v211
      %v358 = vunpack.c.h.b16 %v211
      %v359 = vunpack.c.l.b16 %v212
      %v360 = vunpack.c.h.b16 %v212
      %v361 = vunpack.c.l.b16 %v213
      %v362 = vunpack.c.h.b16 %v213
      %v363 = vunpack.c.l.b16 %v214
      %v364 = vunpack.c.h.b16 %v214
      %v365 = vunpack.c.l.b16 %v215
      %v366 = vunpack.c.h.b16 %v215
      %v367 = vunpack.c.l.b16 %v216
      %v368 = vunpack.c.h.b16 %v216
      %v369 = vunpack.c.l.b16 %v217
      %v370 = vunpack.c.h.b16 %v217
      %v371 = vunpack.c.l.b16 %v218
      %v372 = vunpack.c.h.b16 %v218
      %v373 = vunpack.c.l.b16 %v219
      %v374 = vunpack.c.h.b16 %v219
      %v375 = vunpack.c.l.b16 %v220
      %v376 = vunpack.c.h.b16 %v220
      %v377 = vunpack.c.l.b16 %v221
      %v378 = vunpack.c.h.b16 %v221
      %v379 = vunpack.c.l.b16 %v222
      %v380 = vunpack.c.h.b16 %v222
      %v381 = vunpack.c.l.b16 %v223
      %v382 = vunpack.c.h.b16 %v223
      %v383 = vunpack.c.l.b16 %v224
      %v384 = vunpack.c.h.b16 %v224
      %v385 = vunpack.c.l.b16 %v225
      %v386 = vunpack.c.h.b16 %v225
      %v387 = vunpack.c.l.b16 %v226
      %v388 = vunpack.c.h.b16 %v226
      %v389 = vunpack.c.l.b16 %v227
      %v390 = vunpack.c.h.b16 %v227
      %v391 = vunpack.c.l.b16 %v228
      %v392 = vunpack.c.h.b16 %v228
      %v393 = vunpack.c.l.b16 %v229
      %v394 = vunpack.c.h.b16 %v229
      %v395 = vunpack.c.l.b16 %v230
      %v396 = vunpack.c.h.b16 %v230
      %v397 = vunpack.c.l.b16 %v231
      %v398 = vunpack.c.h.b16 %v231
      %v399 = vunpack.c.l.b16 %v232
      %v400 = vunpack.c.h.b16 %v232
      %v401 = vunpack.c.l.b16 %v233
      %v402 = vunpack.c.h.b16 %v233
      %v403 = vunpack.c.l.b16 %v234
      %v404 = vunpack.c.h.b16 %v234
      %v405 = vunpack.c.l.b16 %v235
      %v406 = vunpack.c.h.b16 %v235
      %v407 = vunpack.c.l.b16 %v236
      %v408 = vunpack.c.h.b16 %v236
      %v409 = vunpack.c.l.b16 %v237
      %v410 = vunpack.c.h.b16 %v237
      %v411 = vunpack.c.l.b16 %v238
      %v412 = vunpack.c.h.b16 %v238
      %v413 = vunpack.c.l.b16 %v239
      %v414 = vunpack.c.h.b16 %v239
      %v415 = vunpack.c.l.b16 %v240
      %v416 = vunpack.c.h.b16 %v240
      %v417 = vunpack.c.l.b16 %v241
      %v418 = vunpack.c.h.b16 %v241
      %v419 = vunpack.c.l.b16 %v242
      %v420 = vunpack.c.h.b16 %v242
      %v421 = vunpack.c.l.b16 %v243
      %v422 = vunpack.c.h.b16 %v243
      %v423 = vunpack.c.l.b16 %v244
      %v424 = vunpack.c.h.b16 %v244
      %v425 = vunpack.c.l.b16 %v245
      %v426 = vunpack.c.h.b16 %v245
      %v427 = vunpack.c.l.b16 %v246
      %v428 = vunpack.c.h.b16 %v246
      %v429 = vunpack.c.l.b16 %v247
      %v430 = vunpack.c.h.b16 %v247
      %v431 = vunpack.c.l.b16 %v248
      %v432 = vunpack.c.h.b16 %v248
      %v433 = vunpack.c.l.b16 %v249
      %v434 = vunpack.c.h.b16 %v249
      %v435 = vunpack.c.l.b16 %v250
      %v436 = vunpack.c.h.b16 %v250
      %v437 = vunpack.c.l.b16 %v251
      %v438 = vunpack.c.h.b16 %v251
      %v439 = vunpack.c.l.b16 %v252
      %v440 = vunpack.c.h.b16 %v252
      %v441 = vunpack.c.l.b16 %v253
      %v442 = vunpack.c.h.b16 %v253
      %v443 = vunpack.c.l.b16 %v254
      %v444 = vunpack.c.h.b16 %v254
      %v445 = vunpack.c.l.b16 %v255
      %v446 = vunpack.c.h.b16 %v255
      %v447 = vunpack.c.l.b16 %v256
      %v448 = vunpack.c.h.b16 %v256
      %v449 = vunpack.c.l.b16 %v257
      %v450 = vunpack.c.h.b16 %v257
      %v451 = vunpack.c.l.b16 %v258
      %v452 = vunpack.c.h.b16 %v258
      %v453 = vunpack.c.l.b16 %v259
      %v454 = vunpack.c.h.b16 %v259
      %v455 = vunpack.c.l.b16 %v260
      %v456 = vunpack.c.h.b16 %v260
      %v457 = vunpack.c.l.b16 %v261
      %v458 = vunpack.c.h.b16 %v261
      %v459 = vunpack.c.l.b16 %v262
      %v460 = vunpack.c.h.b16 %v262
      %v461 = vunpack.c.l.b16 %v263
      %v462 = vunpack.c.h.b16 %v263
      %v463 = vunpack.c.l.b16 %v264
      %v464 = vunpack.c.h.b16 %v264
      %v465 = vunpack.c.l.b16 %v265
      %v466 = vunpack.c.h.b16 %v265
      %v467 = vunpack.c.l.b16 %v266
      %v468 = vunpack.c.h.b16 %v266
      %v469 = vunpack.c.l.b16 %v267
      %v470 = vunpack.c.h.b16 %v267
      %v471 = vunpack.c.l.b16 %v268
      %v472 = vunpack.c.h.b16 %v268
      %v473 = vunpack.c.l.b16 %v269
      %v474 = vunpack.c.h.b16 %v269
      %v475 = vunpack.c.l.b16 %v270
      %v476 = vunpack.c.h.b16 %v270
      %v477 = vunpack.c.l.b16 %v271
      %v478 = vunpack.c.h.b16 %v271
      %v479 = vunpack.c.l.b16 %v272
      %v480 = vunpack.c.h.b16 %v272
      %v481 = vunpack.c.l.b16 %v273
      %v482 = vunpack.c.h.b16 %v273
      %v483 = vpack.c.b16 %v387, %v355
      %v484 = vpack.c.b16 %v388, %v356
      %v485 = vpack.c.b16 %v389, %v357
      %v486 = vpack.c.b16 %v390, %v358
      %v487 = vpack.c.b16 %v391, %v359
      %v488 = vpack.c.b16 %v392, %v360
      %v489 = vpack.c.b16 %v393, %v361
      %v490 = vpack.c.b16 %v394, %v362
      %v491 = vpack.c.b16 %v395, %v363
      %v492 = vpack.c.b16 %v396, %v364
      %v493 = vpack.c.b16 %v397, %v365
      %v494 = vpack.c.b16 %v398, %v366
      %v495 = vpack.c.b16 %v399, %v367
      %v496 = vpack.c.b16 %v400, %v368
      %v497 = vpack.c.b16 %v401, %v369
      %v498 = vpack.c.b16 %v402, %v370
      %v499 = vpack.c.b16 %v403, %v371
      %v500 = vpack.c.b16 %v404, %v372
      %v501 = vpack.c.b16 %v405, %v373
      %v502 = vpack.c.b16 %v406, %v374
      %v503 = vpack.c.b16 %v407, %v375
      %v504 = vpack.c.b16 %v408, %v376
      %v505 = vpack.c.b16 %v409, %v377
      %v506 = vpack.c.b16 %v410, %v378
      %v507 = vpack.c.b16 %v411, %v379
      %v508 = vpack.c.b16 %v412, %v380
      %v509 = vpack.c.b16 %v413, %v381
      %v510 = vpack.c.b16 %v414, %v382
      %v511 = vpack.c.b16 %v415, %v383
      %v512 = vpack.c.b16 %v416, %v384
      %v513 = vpack.c.b16 %v417, %v385
      %v514 = vpack.c.b16 %v418, %v386
      %v515 = vpack.c.b16 %v451, %v419
      %v516 = vpack.c.b16 %v452, %v420
      %v517 = vpack.c.b16 %v453, %v421
      %v518 = vpack.c.b16 %v454, %v422
      %v519 = vpack.c.b16 %v455, %v423
      %v520 = vpack.c.b16 %v456, %v424
      %v521 = vpack.c.b16 %v457, %v425
      %v522 = vpack.c.b16 %v458, %v426
      %v523 = vpack.c.b16 %v459, %v427
      %v524 = vpack.c.b16 %v460, %v428
      %v525 = vpack.c.b16 %v461, %v429
      %v526 = vpack.c.b16 %v462, %v430
      %v527 = vpack.c.b16 %v463, %v431
      %v528 = vpack.c.b16 %v464, %v432
      %v529 = vpack.c.b16 %v465, %v433
      %v530 = vpack.c.b16 %v466, %v434
      %v531 = vpack.c.b16 %v467, %v435
      %v532 = vpack.c.b16 %v468, %v436
      %v533 = vpack.c.b16 %v469, %v437
      %v534 = vpack.c.b16 %v470, %v438
      %v535 = vpack.c.b16 %v471, %v439
      %v536 = vpack.c.b16 %v472, %v440
      %v537 = vpack.c.b16 %v473, %v441
      %v538 = vpack.c.b16 %v474, %v442
      %v539 = vpack.c.b16 %v475, %v443
      %v540 = vpack.c.b16 %v476, %v444
      %v541 = vpack.c.b16 %v477, %v445
      %v542 = vpack.c.b16 %v478, %v446
      %v543 = vpack.c.b16 %v479, %v447
      %v544 = vpack.c.b16 %v480, %v448
      %v545 = vpack.c.b16 %v481, %v449
      %v546 = vpack.c.b16 %v482, %v450
      %vm611 = vcmask 261120
      %v613 = vsel %vm611, %v290, 0
      %615 = vmatprep.subr.bf16.mxu0 0
      %616 = vmatpush1.bf16.msra.mxu0 0
      %617 = vmatprep.subr.bf16.mxu0 0
      %618 = vmatpush1.bf16.msra.mxu0 0
      %619 = vmatprep.subr.bf16.mxu0 0
      %620 = vmatpush1.bf16.msra.mxu0 0
      %621 = vmatprep.subr.bf16.mxu0 0
      %622 = vmatpush1.bf16.msra.mxu0 0
      %623 = vmatprep.subr.bf16.mxu0 0
      %624 = vmatpush1.bf16.msra.mxu0 0
      %625 = vmatprep.subr.bf16.mxu0 0
      %626 = vmatpush1.bf16.msra.mxu0 0
      %627 = vmatprep.subr.bf16.mxu0 %v516
      %628 = vmatpush1.bf16.msra.mxu0 %v515
      %629 = vmatprep.subr.bf16.mxu0 %v484
      %630 = vmatpush1.bf16.msra.mxu0 %v483
      %631 = vmatprep.subr.bf16.mxu0 0
      %632 = vmatpush2.bf16.msra.mxu0 0
      %633 = vmatprep.subr.bf16.mxu0 0
      %634 = vmatpush2.bf16.msra.mxu0 0
      %635 = vmatprep.subr.bf16.mxu0 0
      %636 = vmatpush2.bf16.msra.mxu0 0
      %637 = vmatprep.subr.bf16.mxu0 0
      %638 = vmatpush2.bf16.msra.mxu0 0
      %639 = vmatprep.subr.bf16.mxu0 0
      %640 = vmatpush2.bf16.msra.mxu0 0
      %641 = vmatprep.subr.bf16.mxu0 0
      %642 = vmatpush2.bf16.msra.mxu0 0
      %643 = vmatprep.subr.bf16.mxu0 0
      %644 = vmatpush2.bf16.msra.mxu0 0
      %645 = vmatprep.subr.bf16.mxu0 0
      %646 = vmatpush2.bf16.msra.mxu0 0
      %647 = vmatprep.mubr.bf16.mxu0 0
      %648 = vmatmul.mubr.bf16.gmra.mxu0 %v613
      %v649 = vpop.f32.mrf.mxu0
      %v650 = vadd.f32 %v279, %v649
      %v651 = vpop.f32.mrf.mxu0
      %v652 = vadd.f32 %v279, %v651
      %v653 = vpop.f32.mrf.mxu0
      %v654 = vadd.f32 %v284, %v653
      %v655 = vpop.f32.mrf.mxu0
      %v656 = vadd.f32 %v284, %v655
      %657 = vdwg.mxu0
      %658 = vmatprep.subr.bf16.mxu0 0
      %659 = vmatpush1.bf16.msra.mxu0 0
      %660 = vmatprep.subr.bf16.mxu0 0
      %661 = vmatpush1.bf16.msra.mxu0 0
      %662 = vmatprep.subr.bf16.mxu0 0
      %663 = vmatpush1.bf16.msra.mxu0 0
      %664 = vmatprep.subr.bf16.mxu0 0
      %665 = vmatpush1.bf16.msra.mxu0 0
      %666 = vmatprep.subr.bf16.mxu0 0
      %667 = vmatpush1.bf16.msra.mxu0 0
      %668 = vmatprep.subr.bf16.mxu0 0
      %669 = vmatpush1.bf16.msra.mxu0 0
      %670 = vmatprep.subr.bf16.mxu0 %v518
      %671 = vmatpush1.bf16.msra.mxu0 %v517
      %672 = vmatprep.subr.bf16.mxu0 %v486
      %673 = vmatpush1.bf16.msra.mxu0 %v485
      %674 = vmatprep.subr.bf16.mxu0 0
      %675 = vmatpush2.bf16.msra.mxu0 0
      %676 = vmatprep.subr.bf16.mxu0 0
      %677 = vmatpush2.bf16.msra.mxu0 0
      %678 = vmatprep.subr.bf16.mxu0 0
      %679 = vmatpush2.bf16.msra.mxu0 0
      %680 = vmatprep.subr.bf16.mxu0 0
      %681 = vmatpush2.bf16.msra.mxu0 0
      %682 = vmatprep.subr.bf16.mxu0 0
      %683 = vmatpush2.bf16.msra.mxu0 0
      %684 = vmatprep.subr.bf16.mxu0 0
      %685 = vmatpush2.bf16.msra.mxu0 0
      %686 = vmatprep.subr.bf16.mxu0 0
      %687 = vmatpush2.bf16.msra.mxu0 0
      %688 = vmatprep.subr.bf16.mxu0 0
      %689 = vmatpush2.bf16.msra.mxu0 0
      %690 = vmatprep.mubr.bf16.mxu0 0
      %691 = vmatmul.mubr.bf16.gmra.mxu0 %v613
      %v692 = vpop.f32.mrf.mxu0
      %v693 = vadd.f32 %v279, %v692
      %v694 = vpop.f32.mrf.mxu0
      %v695 = vadd.f32 %v279, %v694
      %v696 = vpop.f32.mrf.mxu0
      %v697 = vadd.f32 %v284, %v696
      %v698 = vpop.f32.mrf.mxu0
      %v699 = vadd.f32 %v284, %v698
      %700 = vdwg.mxu0
      %701 = vmatprep.subr.bf16.mxu0 0
      %702 = vmatpush1.bf16.msra.mxu0 0
      %703 = vmatprep.subr.bf16.mxu0 0
      %704 = vmatpush1.bf16.msra.mxu0 0
      %705 = vmatprep.subr.bf16.mxu0 0
      %706 = vmatpush1.bf16.msra.mxu0 0
      %707 = vmatprep.subr.bf16.mxu0 0
      %708 = vmatpush1.bf16.msra.mxu0 0
      %709 = vmatprep.subr.bf16.mxu0 0
      %710 = vmatpush1.bf16.msra.mxu0 0
      %711 = vmatprep.subr.bf16.mxu0 0
      %712 = vmatpush1.bf16.msra.mxu0 0
      %713 = vmatprep.subr.bf16.mxu0 %v520
      %714 = vmatpush1.bf16.msra.mxu0 %v519
      %715 = vmatprep.subr.bf16.mxu0 %v488
      %716 = vmatpush1.bf16.msra.mxu0 %v487
      %717 = vmatprep.subr.bf16.mxu0 0
      %718 = vmatpush2.bf16.msra.mxu0 0
      %719 = vmatprep.subr.bf16.mxu0 0
      %720 = vmatpush2.bf16.msra.mxu0 0
      %721 = vmatprep.subr.bf16.mxu0 0
      %722 = vmatpush2.bf16.msra.mxu0 0
      %723 = vmatprep.subr.bf16.mxu0 0
      %724 = vmatpush2.bf16.msra.mxu0 0
      %725 = vmatprep.subr.bf16.mxu0 0
      %726 = vmatpush2.bf16.msra.mxu0 0
      %727 = vmatprep.subr.bf16.mxu0 0
      %728 = vmatpush2.bf16.msra.mxu0 0
      %729 = vmatprep.subr.bf16.mxu0 0
      %730 = vmatpush2.bf16.msra.mxu0 0
      %731 = vmatprep.subr.bf16.mxu0 0
      %732 = vmatpush2.bf16.msra.mxu0 0
      %733 = vmatprep.mubr.bf16.mxu0 0
      %734 = vmatmul.mubr.bf16.gmra.mxu0 %v613
      %v735 = vpop.f32.mrf.mxu0
      %v736 = vadd.f32 %v279, %v735
      %v737 = vpop.f32.mrf.mxu0
      %v738 = vadd.f32 %v279, %v737
      %v739 = vpop.f32.mrf.mxu0
      %v740 = vadd.f32 %v284, %v739
      %v741 = vpop.f32.mrf.mxu0
      %v742 = vadd.f32 %v284, %v741
      %743 = vdwg.mxu0
      %744 = vmatprep.subr.bf16.mxu0 0
      %745 = vmatpush1.bf16.msra.mxu0 0
      %746 = vmatprep.subr.bf16.mxu0 0
      %747 = vmatpush1.bf16.msra.mxu0 0
      %748 = vmatprep.subr.bf16.mxu0 0
      %749 = vmatpush1.bf16.msra.mxu0 0
      %750 = vmatprep.subr.bf16.mxu0 0
      %751 = vmatpush1.bf16.msra.mxu0 0
      %752 = vmatprep.subr.bf16.mxu0 0
      %753 = vmatpush1.bf16.msra.mxu0 0
      %754 = vmatprep.subr.bf16.mxu0 0
      %755 = vmatpush1.bf16.msra.mxu0 0
      %756 = vmatprep.subr.bf16.mxu0 %v522
      %757 = vmatpush1.bf16.msra.mxu0 %v521
      %758 = vmatprep.subr.bf16.mxu0 %v490
      %759 = vmatpush1.bf16.msra.mxu0 %v489
      %760 = vmatprep.subr.bf16.mxu0 0
      %761 = vmatpush2.bf16.msra.mxu0 0
      %762 = vmatprep.subr.bf16.mxu0 0
      %763 = vmatpush2.bf16.msra.mxu0 0
      %764 = vmatprep.subr.bf16.mxu0 0
      %765 = vmatpush2.bf16.msra.mxu0 0
      %766 = vmatprep.subr.bf16.mxu0 0
      %767 = vmatpush2.bf16.msra.mxu0 0
      %768 = vmatprep.subr.bf16.mxu0 0
      %769 = vmatpush2.bf16.msra.mxu0 0
      %770 = vmatprep.subr.bf16.mxu0 0
      %771 = vmatpush2.bf16.msra.mxu0 0
      %772 = vmatprep.subr.bf16.mxu0 0
      %773 = vmatpush2.bf16.msra.mxu0 0
      %774 = vmatprep.subr.bf16.mxu0 0
      %775 = vmatpush2.bf16.msra.mxu0 0
      %776 = vmatprep.mubr.bf16.mxu0 0
      %777 = vmatmul.mubr.bf16.gmra.mxu0 %v613
      %v778 = vpop.f32.mrf.mxu0
      %v779 = vadd.f32 %v279, %v778
      %v780 = vpop.f32.mrf.mxu0
      %v781 = vadd.f32 %v279, %v780
      %v782 = vpop.f32.mrf.mxu0
      %v783 = vadd.f32 %v284, %v782
      %v784 = vpop.f32.mrf.mxu0
      %v785 = vadd.f32 %v284, %v784
      %786 = vdwg.mxu0
      %787 = vmatprep.subr.bf16.mxu0 0
      %788 = vmatpush1.bf16.msra.mxu0 0
      %789 = vmatprep.subr.bf16.mxu0 0
      %790 = vmatpush1.bf16.msra.mxu0 0
      %791 = vmatprep.subr.bf16.mxu0 0
      %792 = vmatpush1.bf16.msra.mxu0 0
      %793 = vmatprep.subr.bf16.mxu0 0
      %794 = vmatpush1.bf16.msra.mxu0 0
      %795 = vmatprep.subr.bf16.mxu0 0
      %796 = vmatpush1.bf16.msra.mxu0 0
      %797 = vmatprep.subr.bf16.mxu0 0
      %798 = vmatpush1.bf16.msra.mxu0 0
      %799 = vmatprep.subr.bf16.mxu0 %v524
      %800 = vmatpush1.bf16.msra.mxu0 %v523
      %801 = vmatprep.subr.bf16.mxu0 %v492
      %802 = vmatpush1.bf16.msra.mxu0 %v491
      %803 = vmatprep.subr.bf16.mxu0 0
      %804 = vmatpush2.bf16.msra.mxu0 0
      %805 = vmatprep.subr.bf16.mxu0 0
      %806 = vmatpush2.bf16.msra.mxu0 0
      %807 = vmatprep.subr.bf16.mxu0 0
      %808 = vmatpush2.bf16.msra.mxu0 0
      %809 = vmatprep.subr.bf16.mxu0 0
      %810 = vmatpush2.bf16.msra.mxu0 0
      %811 = vmatprep.subr.bf16.mxu0 0
      %812 = vmatpush2.bf16.msra.mxu0 0
      %813 = vmatprep.subr.bf16.mxu0 0
      %814 = vmatpush2.bf16.msra.mxu0 0
      %815 = vmatprep.subr.bf16.mxu0 0
      %816 = vmatpush2.bf16.msra.mxu0 0
      %817 = vmatprep.subr.bf16.mxu0 0
      %818 = vmatpush2.bf16.msra.mxu0 0
      %819 = vmatprep.mubr.bf16.mxu0 0
      %820 = vmatmul.mubr.bf16.gmra.mxu0 %v613
      %v821 = vpop.f32.mrf.mxu0
      %v822 = vadd.f32 %v279, %v821
      %v823 = vpop.f32.mrf.mxu0
      %v824 = vadd.f32 %v279, %v823
      %v825 = vpop.f32.mrf.mxu0
      %v826 = vadd.f32 %v284, %v825
      %v827 = vpop.f32.mrf.mxu0
      %v828 = vadd.f32 %v284, %v827
      %829 = vdwg.mxu0
      %830 = vmatprep.subr.bf16.mxu0 0
      %831 = vmatpush1.bf16.msra.mxu0 0
      %832 = vmatprep.subr.bf16.mxu0 0
      %833 = vmatpush1.bf16.msra.mxu0 0
      %834 = vmatprep.subr.bf16.mxu0 0
      %835 = vmatpush1.bf16.msra.mxu0 0
      %836 = vmatprep.subr.bf16.mxu0 0
      %837 = vmatpush1.bf16.msra.mxu0 0
      %838 = vmatprep.subr.bf16.mxu0 0
      %839 = vmatpush1.bf16.msra.mxu0 0
      %840 = vmatprep.subr.bf16.mxu0 0
      %841 = vmatpush1.bf16.msra.mxu0 0
      %842 = vmatprep.subr.bf16.mxu0 %v526
      %843 = vmatpush1.bf16.msra.mxu0 %v525
      %844 = vmatprep.subr.bf16.mxu0 %v494
      %845 = vmatpush1.bf16.msra.mxu0 %v493
      %846 = vmatprep.subr.bf16.mxu0 0
      %847 = vmatpush2.bf16.msra.mxu0 0
      %848 = vmatprep.subr.bf16.mxu0 0
      %849 = vmatpush2.bf16.msra.mxu0 0
      %850 = vmatprep.subr.bf16.mxu0 0
      %851 = vmatpush2.bf16.msra.mxu0 0
      %852 = vmatprep.subr.bf16.mxu0 0
      %853 = vmatpush2.bf16.msra.mxu0 0
      %854 = vmatprep.subr.bf16.mxu0 0
      %855 = vmatpush2.bf16.msra.mxu0 0
      %856 = vmatprep.subr.bf16.mxu0 0
      %857 = vmatpush2.bf16.msra.mxu0 0
      %858 = vmatprep.subr.bf16.mxu0 0
      %859 = vmatpush2.bf16.msra.mxu0 0
      %860 = vmatprep.subr.bf16.mxu0 0
      %861 = vmatpush2.bf16.msra.mxu0 0
      %862 = vmatprep.mubr.bf16.mxu0 0
      %863 = vmatmul.mubr.bf16.gmra.mxu0 %v613
      %v864 = vpop.f32.mrf.mxu0
      %v865 = vadd.f32 %v279, %v864
      %v866 = vpop.f32.mrf.mxu0
      %v867 = vadd.f32 %v279, %v866
      %v868 = vpop.f32.mrf.mxu0
      %v869 = vadd.f32 %v284, %v868
      %v870 = vpop.f32.mrf.mxu0
      %v871 = vadd.f32 %v284, %v870
      %872 = vdwg.mxu0
      %873 = vmatprep.subr.bf16.mxu0 0
      %874 = vmatpush1.bf16.msra.mxu0 0
      %875 = vmatprep.subr.bf16.mxu0 0
      %876 = vmatpush1.bf16.msra.mxu0 0
      %877 = vmatprep.subr.bf16.mxu0 0
      %878 = vmatpush1.bf16.msra.mxu0 0
      %879 = vmatprep.subr.bf16.mxu0 0
      %880 = vmatpush1.bf16.msra.mxu0 0
      %881 = vmatprep.subr.bf16.mxu0 0
      %882 = vmatpush1.bf16.msra.mxu0 0
      %883 = vmatprep.subr.bf16.mxu0 0
      %884 = vmatpush1.bf16.msra.mxu0 0
      %885 = vmatprep.subr.bf16.mxu0 %v528
      %886 = vmatpush1.bf16.msra.mxu0 %v527
      %887 = vmatprep.subr.bf16.mxu0 %v496
      %888 = vmatpush1.bf16.msra.mxu0 %v495
      %889 = vmatprep.subr.bf16.mxu0 0
      %890 = vmatpush2.bf16.msra.mxu0 0
      %891 = vmatprep.subr.bf16.mxu0 0
      %892 = vmatpush2.bf16.msra.mxu0 0
      %893 = vmatprep.subr.bf16.mxu0 0
      %894 = vmatpush2.bf16.msra.mxu0 0
      %895 = vmatprep.subr.bf16.mxu0 0
      %896 = vmatpush2.bf16.msra.mxu0 0
      %897 = vmatprep.subr.bf16.mxu0 0
      %898 = vmatpush2.bf16.msra.mxu0 0
      %899 = vmatprep.subr.bf16.mxu0 0
      %900 = vmatpush2.bf16.msra.mxu0 0
      %901 = vmatprep.subr.bf16.mxu0 0
      %902 = vmatpush2.bf16.msra.mxu0 0
      %903 = vmatprep.subr.bf16.mxu0 0
      %904 = vmatpush2.bf16.msra.mxu0 0
      %905 = vmatprep.mubr.bf16.mxu0 0
      %906 = vmatmul.mubr.bf16.gmra.mxu0 %v613
      %v907 = vpop.f32.mrf.mxu0
      %v908 = vadd.f32 %v279, %v907
      %v909 = vpop.f32.mrf.mxu0
      %v910 = vadd.f32 %v279, %v909
      %v911 = vpop.f32.mrf.mxu0
      %v912 = vadd.f32 %v284, %v911
      %v913 = vpop.f32.mrf.mxu0
      %v914 = vadd.f32 %v284, %v913
      %915 = vdwg.mxu0
      %916 = vmatprep.subr.bf16.mxu0 0
      %917 = vmatpush1.bf16.msra.mxu0 0
      %918 = vmatprep.subr.bf16.mxu0 0
      %919 = vmatpush1.bf16.msra.mxu0 0
      %920 = vmatprep.subr.bf16.mxu0 0
      %921 = vmatpush1.bf16.msra.mxu0 0
      %922 = vmatprep.subr.bf16.mxu0 0
      %923 = vmatpush1.bf16.msra.mxu0 0
      %924 = vmatprep.subr.bf16.mxu0 0
      %925 = vmatpush1.bf16.msra.mxu0 0
      %926 = vmatprep.subr.bf16.mxu0 0
      %927 = vmatpush1.bf16.msra.mxu0 0
      %928 = vmatprep.subr.bf16.mxu0 %v530
      %929 = vmatpush1.bf16.msra.mxu0 %v529
      %930 = vmatprep.subr.bf16.mxu0 %v498
      %931 = vmatpush1.bf16.msra.mxu0 %v497
      %932 = vmatprep.subr.bf16.mxu0 0
      %933 = vmatpush2.bf16.msra.mxu0 0
      %934 = vmatprep.subr.bf16.mxu0 0
      %935 = vmatpush2.bf16.msra.mxu0 0
      %936 = vmatprep.subr.bf16.mxu0 0
      %937 = vmatpush2.bf16.msra.mxu0 0
      %938 = vmatprep.subr.bf16.mxu0 0
      %939 = vmatpush2.bf16.msra.mxu0 0
      %940 = vmatprep.subr.bf16.mxu0 0
      %941 = vmatpush2.bf16.msra.mxu0 0
      %942 = vmatprep.subr.bf16.mxu0 0
      %943 = vmatpush2.bf16.msra.mxu0 0
      %944 = vmatprep.subr.bf16.mxu0 0
      %945 = vmatpush2.bf16.msra.mxu0 0
      %946 = vmatprep.subr.bf16.mxu0 0
      %947 = vmatpush2.bf16.msra.mxu0 0
      %948 = vmatprep.mubr.bf16.mxu0 0
      %949 = vmatmul.mubr.bf16.gmra.mxu0 %v613
      %v950 = vpop.f32.mrf.mxu0
      %v951 = vadd.f32 %v279, %v950
      %v952 = vpop.f32.mrf.mxu0
      %v953 = vadd.f32 %v279, %v952
      %v954 = vpop.f32.mrf.mxu0
      %v955 = vadd.f32 %v284, %v954
      %v956 = vpop.f32.mrf.mxu0
      %v957 = vadd.f32 %v284, %v956
      %958 = vdwg.mxu0
      %959 = vmatprep.subr.bf16.mxu0 0
      %960 = vmatpush1.bf16.msra.mxu0 0
      %961 = vmatprep.subr.bf16.mxu0 0
      %962 = vmatpush1.bf16.msra.mxu0 0
      %963 = vmatprep.subr.bf16.mxu0 0
      %964 = vmatpush1.bf16.msra.mxu0 0
      %965 = vmatprep.subr.bf16.mxu0 0
      %966 = vmatpush1.bf16.msra.mxu0 0
      %967 = vmatprep.subr.bf16.mxu0 0
      %968 = vmatpush1.bf16.msra.mxu0 0
      %969 = vmatprep.subr.bf16.mxu0 0
      %970 = vmatpush1.bf16.msra.mxu0 0
      %971 = vmatprep.subr.bf16.mxu0 %v532
      %972 = vmatpush1.bf16.msra.mxu0 %v531
      %973 = vmatprep.subr.bf16.mxu0 %v500
      %974 = vmatpush1.bf16.msra.mxu0 %v499
      %975 = vmatprep.subr.bf16.mxu0 0
      %976 = vmatpush2.bf16.msra.mxu0 0
      %977 = vmatprep.subr.bf16.mxu0 0
      %978 = vmatpush2.bf16.msra.mxu0 0
      %979 = vmatprep.subr.bf16.mxu0 0
      %980 = vmatpush2.bf16.msra.mxu0 0
      %981 = vmatprep.subr.bf16.mxu0 0
      %982 = vmatpush2.bf16.msra.mxu0 0
      %983 = vmatprep.subr.bf16.mxu0 0
      %984 = vmatpush2.bf16.msra.mxu0 0
      %985 = vmatprep.subr.bf16.mxu0 0
      %986 = vmatpush2.bf16.msra.mxu0 0
      %987 = vmatprep.subr.bf16.mxu0 0
      %988 = vmatpush2.bf16.msra.mxu0 0
      %989 = vmatprep.subr.bf16.mxu0 0
      %990 = vmatpush2.bf16.msra.mxu0 0
      %991 = vmatprep.mubr.bf16.mxu0 0
      %992 = vmatmul.mubr.bf16.gmra.mxu0 %v613
      %v993 = vpop.f32.mrf.mxu0
      %v994 = vadd.f32 %v279, %v993
      %v995 = vpop.f32.mrf.mxu0
      %v996 = vadd.f32 %v279, %v995
      %v997 = vpop.f32.mrf.mxu0
      %v998 = vadd.f32 %v284, %v997
      %v999 = vpop.f32.mrf.mxu0
      %v1000 = vadd.f32 %v284, %v999
      %1001 = vdwg.mxu0
      %1002 = vmatprep.subr.bf16.mxu0 0
      %1003 = vmatpush1.bf16.msra.mxu0 0
      %1004 = vmatprep.subr.bf16.mxu0 0
      %1005 = vmatpush1.bf16.msra.mxu0 0
      %1006 = vmatprep.subr.bf16.mxu0 0
      %1007 = vmatpush1.bf16.msra.mxu0 0
      %1008 = vmatprep.subr.bf16.mxu0 0
      %1009 = vmatpush1.bf16.msra.mxu0 0
      %1010 = vmatprep.subr.bf16.mxu0 0
      %1011 = vmatpush1.bf16.msra.mxu0 0
      %1012 = vmatprep.subr.bf16.mxu0 0
      %1013 = vmatpush1.bf16.msra.mxu0 0
      %1014 = vmatprep.subr.bf16.mxu0 %v534
      %1015 = vmatpush1.bf16.msra.mxu0 %v533
      %1016 = vmatprep.subr.bf16.mxu0 %v502
      %1017 = vmatpush1.bf16.msra.mxu0 %v501
      %1018 = vmatprep.subr.bf16.mxu0 0
      %1019 = vmatpush2.bf16.msra.mxu0 0
      %1020 = vmatprep.subr.bf16.mxu0 0
      %1021 = vmatpush2.bf16.msra.mxu0 0
      %1022 = vmatprep.subr.bf16.mxu0 0
      %1023 = vmatpush2.bf16.msra.mxu0 0
      %1024 = vmatprep.subr.bf16.mxu0 0
      %1025 = vmatpush2.bf16.msra.mxu0 0
      %1026 = vmatprep.subr.bf16.mxu0 0
      %1027 = vmatpush2.bf16.msra.mxu0 0
      %1028 = vmatprep.subr.bf16.mxu0 0
      %1029 = vmatpush2.bf16.msra.mxu0 0
      %1030 = vmatprep.subr.bf16.mxu0 0
      %1031 = vmatpush2.bf16.msra.mxu0 0
      %1032 = vmatprep.subr.bf16.mxu0 0
      %1033 = vmatpush2.bf16.msra.mxu0 0
      %1034 = vmatprep.mubr.bf16.mxu0 0
      %1035 = vmatmul.mubr.bf16.gmra.mxu0 %v613
      %v1036 = vpop.f32.mrf.mxu0
      %v1037 = vadd.f32 %v279, %v1036
      %v1038 = vpop.f32.mrf.mxu0
      %v1039 = vadd.f32 %v279, %v1038
      %v1040 = vpop.f32.mrf.mxu0
      %v1041 = vadd.f32 %v284, %v1040
      %v1042 = vpop.f32.mrf.mxu0
      %v1043 = vadd.f32 %v284, %v1042
      %1044 = vdwg.mxu0
      %1045 = vmatprep.subr.bf16.mxu0 0
      %1046 = vmatpush1.bf16.msra.mxu0 0
      %1047 = vmatprep.subr.bf16.mxu0 0
      %1048 = vmatpush1.bf16.msra.mxu0 0
      %1049 = vmatprep.subr.bf16.mxu0 0
      %1050 = vmatpush1.bf16.msra.mxu0 0
      %1051 = vmatprep.subr.bf16.mxu0 0
      %1052 = vmatpush1.bf16.msra.mxu0 0
      %1053 = vmatprep.subr.bf16.mxu0 0
      %1054 = vmatpush1.bf16.msra.mxu0 0
      %1055 = vmatprep.subr.bf16.mxu0 0
      %1056 = vmatpush1.bf16.msra.mxu0 0
      %1057 = vmatprep.subr.bf16.mxu0 %v536
      %1058 = vmatpush1.bf16.msra.mxu0 %v535
      %1059 = vmatprep.subr.bf16.mxu0 %v504
      %1060 = vmatpush1.bf16.msra.mxu0 %v503
      %1061 = vmatprep.subr.bf16.mxu0 0
      %1062 = vmatpush2.bf16.msra.mxu0 0
      %1063 = vmatprep.subr.bf16.mxu0 0
      %1064 = vmatpush2.bf16.msra.mxu0 0
      %1065 = vmatprep.subr.bf16.mxu0 0
      %1066 = vmatpush2.bf16.msra.mxu0 0
      %1067 = vmatprep.subr.bf16.mxu0 0
      %1068 = vmatpush2.bf16.msra.mxu0 0
      %1069 = vmatprep.subr.bf16.mxu0 0
      %1070 = vmatpush2.bf16.msra.mxu0 0
      %1071 = vmatprep.subr.bf16.mxu0 0
      %1072 = vmatpush2.bf16.msra.mxu0 0
      %1073 = vmatprep.subr.bf16.mxu0 0
      %1074 = vmatpush2.bf16.msra.mxu0 0
      %1075 = vmatprep.subr.bf16.mxu0 0
      %1076 = vmatpush2.bf16.msra.mxu0 0
      %1077 = vmatprep.mubr.bf16.mxu0 0
      %1078 = vmatmul.mubr.bf16.gmra.mxu0 %v613
      %v1079 = vpop.f32.mrf.mxu0
      %v1080 = vadd.f32 %v279, %v1079
      %v1081 = vpop.f32.mrf.mxu0
      %v1082 = vadd.f32 %v279, %v1081
      %v1083 = vpop.f32.mrf.mxu0
      %v1084 = vadd.f32 %v284, %v1083
      %v1085 = vpop.f32.mrf.mxu0
      %v1086 = vadd.f32 %v284, %v1085
      %1087 = vdwg.mxu0
      %1088 = vmatprep.subr.bf16.mxu0 0
      %1089 = vmatpush1.bf16.msra.mxu0 0
      %1090 = vmatprep.subr.bf16.mxu0 0
      %1091 = vmatpush1.bf16.msra.mxu0 0
      %1092 = vmatprep.subr.bf16.mxu0 0
      %1093 = vmatpush1.bf16.msra.mxu0 0
      %1094 = vmatprep.subr.bf16.mxu0 0
      %1095 = vmatpush1.bf16.msra.mxu0 0
      %1096 = vmatprep.subr.bf16.mxu0 0
      %1097 = vmatpush1.bf16.msra.mxu0 0
      %1098 = vmatprep.subr.bf16.mxu0 0
      %1099 = vmatpush1.bf16.msra.mxu0 0
      %1100 = vmatprep.subr.bf16.mxu0 %v538
      %1101 = vmatpush1.bf16.msra.mxu0 %v537
      %1102 = vmatprep.subr.bf16.mxu0 %v506
      %1103 = vmatpush1.bf16.msra.mxu0 %v505
      %1104 = vmatprep.subr.bf16.mxu0 0
      %1105 = vmatpush2.bf16.msra.mxu0 0
      %1106 = vmatprep.subr.bf16.mxu0 0
      %1107 = vmatpush2.bf16.msra.mxu0 0
      %1108 = vmatprep.subr.bf16.mxu0 0
      %1109 = vmatpush2.bf16.msra.mxu0 0
      %1110 = vmatprep.subr.bf16.mxu0 0
      %1111 = vmatpush2.bf16.msra.mxu0 0
      %1112 = vmatprep.subr.bf16.mxu0 0
      %1113 = vmatpush2.bf16.msra.mxu0 0
      %1114 = vmatprep.subr.bf16.mxu0 0
      %1115 = vmatpush2.bf16.msra.mxu0 0
      %1116 = vmatprep.subr.bf16.mxu0 0
      %1117 = vmatpush2.bf16.msra.mxu0 0
      %1118 = vmatprep.subr.bf16.mxu0 0
      %1119 = vmatpush2.bf16.msra.mxu0 0
      %1120 = vmatprep.mubr.bf16.mxu0 0
      %1121 = vmatmul.mubr.bf16.gmra.mxu0 %v613
      %v1122 = vpop.f32.mrf.mxu0
      %v1123 = vadd.f32 %v279, %v1122
      %v1124 = vpop.f32.mrf.mxu0
      %v1125 = vadd.f32 %v279, %v1124
      %v1126 = vpop.f32.mrf.mxu0
      %v1127 = vadd.f32 %v284, %v1126
      %v1128 = vpop.f32.mrf.mxu0
      %v1129 = vadd.f32 %v284, %v1128
      %1130 = vdwg.mxu0
      %1131 = vmatprep.subr.bf16.mxu0 0
      %1132 = vmatpush1.bf16.msra.mxu0 0
      %1133 = vmatprep.subr.bf16.mxu0 0
      %1134 = vmatpush1.bf16.msra.mxu0 0
      %1135 = vmatprep.subr.bf16.mxu0 0
      %1136 = vmatpush1.bf16.msra.mxu0 0
      %1137 = vmatprep.subr.bf16.mxu0 0
      %1138 = vmatpush1.bf16.msra.mxu0 0
      %1139 = vmatprep.subr.bf16.mxu0 0
      %1140 = vmatpush1.bf16.msra.mxu0 0
      %1141 = vmatprep.subr.bf16.mxu0 0
      %1142 = vmatpush1.bf16.msra.mxu0 0
      %1143 = vmatprep.subr.bf16.mxu0 %v540
      %1144 = vmatpush1.bf16.msra.mxu0 %v539
      %1145 = vmatprep.subr.bf16.mxu0 %v508
      %1146 = vmatpush1.bf16.msra.mxu0 %v507
      %1147 = vmatprep.subr.bf16.mxu0 0
      %1148 = vmatpush2.bf16.msra.mxu0 0
      %1149 = vmatprep.subr.bf16.mxu0 0
      %1150 = vmatpush2.bf16.msra.mxu0 0
      %1151 = vmatprep.subr.bf16.mxu0 0
      %1152 = vmatpush2.bf16.msra.mxu0 0
      %1153 = vmatprep.subr.bf16.mxu0 0
      %1154 = vmatpush2.bf16.msra.mxu0 0
      %1155 = vmatprep.subr.bf16.mxu0 0
      %1156 = vmatpush2.bf16.msra.mxu0 0
      %1157 = vmatprep.subr.bf16.mxu0 0
      %1158 = vmatpush2.bf16.msra.mxu0 0
      %1159 = vmatprep.subr.bf16.mxu0 0
      %1160 = vmatpush2.bf16.msra.mxu0 0
      %1161 = vmatprep.subr.bf16.mxu0 0
      %1162 = vmatpush2.bf16.msra.mxu0 0
      %1163 = vmatprep.mubr.bf16.mxu0 0
      %1164 = vmatmul.mubr.bf16.gmra.mxu0 %v613
      %v1165 = vpop.f32.mrf.mxu0
      %v1166 = vadd.f32 %v279, %v1165
      %v1167 = vpop.f32.mrf.mxu0
      %v1168 = vadd.f32 %v279, %v1167
      %v1169 = vpop.f32.mrf.mxu0
      %v1170 = vadd.f32 %v284, %v1169
      %v1171 = vpop.f32.mrf.mxu0
      %v1172 = vadd.f32 %v284, %v1171
      %1173 = vdwg.mxu0
      %1174 = vmatprep.subr.bf16.mxu0 0
      %1175 = vmatpush1.bf16.msra.mxu0 0
      %1176 = vmatprep.subr.bf16.mxu0 0
      %1177 = vmatpush1.bf16.msra.mxu0 0
      %1178 = vmatprep.subr.bf16.mxu0 0
      %1179 = vmatpush1.bf16.msra.mxu0 0
      %1180 = vmatprep.subr.bf16.mxu0 0
      %1181 = vmatpush1.bf16.msra.mxu0 0
      %1182 = vmatprep.subr.bf16.mxu0 0
      %1183 = vmatpush1.bf16.msra.mxu0 0
      %1184 = vmatprep.subr.bf16.mxu0 0
      %1185 = vmatpush1.bf16.msra.mxu0 0
      %1186 = vmatprep.subr.bf16.mxu0 %v542
      %1187 = vmatpush1.bf16.msra.mxu0 %v541
      %1188 = vmatprep.subr.bf16.mxu0 %v510
      %1189 = vmatpush1.bf16.msra.mxu0 %v509
      %1190 = vmatprep.subr.bf16.mxu0 0
      %1191 = vmatpush2.bf16.msra.mxu0 0
      %1192 = vmatprep.subr.bf16.mxu0 0
      %1193 = vmatpush2.bf16.msra.mxu0 0
      %1194 = vmatprep.subr.bf16.mxu0 0
      %1195 = vmatpush2.bf16.msra.mxu0 0
      %1196 = vmatprep.subr.bf16.mxu0 0
      %1197 = vmatpush2.bf16.msra.mxu0 0
      %1198 = vmatprep.subr.bf16.mxu0 0
      %1199 = vmatpush2.bf16.msra.mxu0 0
      %1200 = vmatprep.subr.bf16.mxu0 0
      %1201 = vmatpush2.bf16.msra.mxu0 0
      %1202 = vmatprep.subr.bf16.mxu0 0
      %1203 = vmatpush2.bf16.msra.mxu0 0
      %1204 = vmatprep.subr.bf16.mxu0 0
      %1205 = vmatpush2.bf16.msra.mxu0 0
      %1206 = vmatprep.mubr.bf16.mxu0 0
      %1207 = vmatmul.mubr.bf16.gmra.mxu0 %v613
      %v1208 = vpop.f32.mrf.mxu0
      %v1209 = vadd.f32 %v279, %v1208
      %v1210 = vpop.f32.mrf.mxu0
      %v1211 = vadd.f32 %v279, %v1210
      %v1212 = vpop.f32.mrf.mxu0
      %v1213 = vadd.f32 %v284, %v1212
      %v1214 = vpop.f32.mrf.mxu0
      %v1215 = vadd.f32 %v284, %v1214
      %1216 = vdwg.mxu0
      %1217 = vmatprep.subr.bf16.mxu0 0
      %1218 = vmatpush1.bf16.msra.mxu0 0
      %1219 = vmatprep.subr.bf16.mxu0 0
      %1220 = vmatpush1.bf16.msra.mxu0 0
      %1221 = vmatprep.subr.bf16.mxu0 0
      %1222 = vmatpush1.bf16.msra.mxu0 0
      %1223 = vmatprep.subr.bf16.mxu0 0
      %1224 = vmatpush1.bf16.msra.mxu0 0
      %1225 = vmatprep.subr.bf16.mxu0 0
      %1226 = vmatpush1.bf16.msra.mxu0 0
      %1227 = vmatprep.subr.bf16.mxu0 0
      %1228 = vmatpush1.bf16.msra.mxu0 0
      %1229 = vmatprep.subr.bf16.mxu0 %v544
      %1230 = vmatpush1.bf16.msra.mxu0 %v543
      %1231 = vmatprep.subr.bf16.mxu0 %v512
      %1232 = vmatpush1.bf16.msra.mxu0 %v511
      %1233 = vmatprep.subr.bf16.mxu0 0
      %1234 = vmatpush2.bf16.msra.mxu0 0
      %1235 = vmatprep.subr.bf16.mxu0 0
      %1236 = vmatpush2.bf16.msra.mxu0 0
      %1237 = vmatprep.subr.bf16.mxu0 0
      %1238 = vmatpush2.bf16.msra.mxu0 0
      %1239 = vmatprep.subr.bf16.mxu0 0
      %1240 = vmatpush2.bf16.msra.mxu0 0
      %1241 = vmatprep.subr.bf16.mxu0 0
      %1242 = vmatpush2.bf16.msra.mxu0 0
      %1243 = vmatprep.subr.bf16.mxu0 0
      %1244 = vmatpush2.bf16.msra.mxu0 0
      %1245 = vmatprep.subr.bf16.mxu0 0
      %1246 = vmatpush2.bf16.msra.mxu0 0
      %1247 = vmatprep.subr.bf16.mxu0 0
      %1248 = vmatpush2.bf16.msra.mxu0 0
      %1249 = vmatprep.mubr.bf16.mxu0 0
      %1250 = vmatmul.mubr.bf16.gmra.mxu0 %v613
      %v1251 = vpop.f32.mrf.mxu0
      %v1252 = vadd.f32 %v279, %v1251
      %v1253 = vpop.f32.mrf.mxu0
      %v1254 = vadd.f32 %v279, %v1253
      %v1255 = vpop.f32.mrf.mxu0
      %v1256 = vadd.f32 %v284, %v1255
      %v1257 = vpop.f32.mrf.mxu0
      %v1258 = vadd.f32 %v284, %v1257
      %1259 = vdwg.mxu0
      %1260 = vmatprep.subr.bf16.mxu0 0
      %1261 = vmatpush1.bf16.msra.mxu0 0
      %1262 = vmatprep.subr.bf16.mxu0 0
      %1263 = vmatpush1.bf16.msra.mxu0 0
      %1264 = vmatprep.subr.bf16.mxu0 0
      %1265 = vmatpush1.bf16.msra.mxu0 0
      %1266 = vmatprep.subr.bf16.mxu0 0
      %1267 = vmatpush1.bf16.msra.mxu0 0
      %1268 = vmatprep.subr.bf16.mxu0 0
      %1269 = vmatpush1.bf16.msra.mxu0 0
      %1270 = vmatprep.subr.bf16.mxu0 0
      %1271 = vmatpush1.bf16.msra.mxu0 0
      %1272 = vmatprep.subr.bf16.mxu0 %v546
      %1273 = vmatpush1.bf16.msra.mxu0 %v545
      %1274 = vmatprep.subr.bf16.mxu0 %v514
      %1275 = vmatpush1.bf16.msra.mxu0 %v513
      %1276 = vmatprep.subr.bf16.mxu0 0
      %1277 = vmatpush2.bf16.msra.mxu0 0
      %1278 = vmatprep.subr.bf16.mxu0 0
      %1279 = vmatpush2.bf16.msra.mxu0 0
      %1280 = vmatprep.subr.bf16.mxu0 0
      %1281 = vmatpush2.bf16.msra.mxu0 0
      %1282 = vmatprep.subr.bf16.mxu0 0
      %1283 = vmatpush2.bf16.msra.mxu0 0
      %1284 = vmatprep.subr.bf16.mxu0 0
      %1285 = vmatpush2.bf16.msra.mxu0 0
      %1286 = vmatprep.subr.bf16.mxu0 0
      %1287 = vmatpush2.bf16.msra.mxu0 0
      %1288 = vmatprep.subr.bf16.mxu0 0
      %1289 = vmatpush2.bf16.msra.mxu0 0
      %1290 = vmatprep.subr.bf16.mxu0 0
      %1291 = vmatpush2.bf16.msra.mxu0 0
      %1292 = vmatprep.mubr.bf16.mxu0 0
      %1293 = vmatmul.mubr.bf16.gmra.mxu0 %v613
      %v1294 = vpop.f32.mrf.mxu0
      %v1295 = vadd.f32 %v279, %v1294
      %v1296 = vpop.f32.mrf.mxu0
      %v1297 = vadd.f32 %v279, %v1296
      %v1298 = vpop.f32.mrf.mxu0
      %v1299 = vadd.f32 %v284, %v1298
      %v1300 = vpop.f32.mrf.mxu0
      %v1301 = vadd.f32 %v284, %v1300
      %1302 = vdwg.mxu0
      %v1303 = vmax.f32 %v650, 0.0
      %v1304 = vmax.f32 %v652, 0.0
      %v1305 = vmax.f32 %v693, 0.0
      %v1306 = vmax.f32 %v695, 0.0
      %v1307 = vmax.f32 %v736, 0.0
      %v1308 = vmax.f32 %v738, 0.0
      %v1309 = vmax.f32 %v779, 0.0
      %v1310 = vmax.f32 %v781, 0.0
      %v1311 = vmax.f32 %v822, 0.0
      %v1312 = vmax.f32 %v824, 0.0
      %v1313 = vmax.f32 %v865, 0.0
      %v1314 = vmax.f32 %v867, 0.0
      %v1315 = vmax.f32 %v908, 0.0
      %v1316 = vmax.f32 %v910, 0.0
      %v1317 = vmax.f32 %v951, 0.0
      %v1318 = vmax.f32 %v953, 0.0
      %v1319 = vmax.f32 %v994, 0.0
      %v1320 = vmax.f32 %v996, 0.0
      %v1321 = vmax.f32 %v1037, 0.0
      %v1322 = vmax.f32 %v1039, 0.0
      %v1323 = vmax.f32 %v1080, 0.0
      %v1324 = vmax.f32 %v1082, 0.0
      %v1325 = vmax.f32 %v1123, 0.0
      %v1326 = vmax.f32 %v1125, 0.0
      %v1327 = vmax.f32 %v1166, 0.0
      %v1328 = vmax.f32 %v1168, 0.0
      %v1329 = vmax.f32 %v1209, 0.0
      %v1330 = vmax.f32 %v1211, 0.0
      %v1331 = vmax.f32 %v1252, 0.0
      %v1332 = vmax.f32 %v1254, 0.0
      %v1333 = vmax.f32 %v1295, 0.0
      %v1334 = vmax.f32 %v1297, 0.0
      %v1335 = vmax.f32 %v654, 0.0
      %v1336 = vmax.f32 %v656, 0.0
      %v1337 = vmax.f32 %v697, 0.0
      %v1338 = vmax.f32 %v699, 0.0
      %v1339 = vmax.f32 %v740, 0.0
      %v1340 = vmax.f32 %v742, 0.0
      %v1341 = vmax.f32 %v783, 0.0
      %v1342 = vmax.f32 %v785, 0.0
      %v1343 = vmax.f32 %v826, 0.0
      %v1344 = vmax.f32 %v828, 0.0
      %v1345 = vmax.f32 %v869, 0.0
      %v1346 = vmax.f32 %v871, 0.0
      %v1347 = vmax.f32 %v912, 0.0
      %v1348 = vmax.f32 %v914, 0.0
      %v1349 = vmax.f32 %v955, 0.0
      %v1350 = vmax.f32 %v957, 0.0
      %v1351 = vmax.f32 %v998, 0.0
      %v1352 = vmax.f32 %v1000, 0.0
      %v1353 = vmax.f32 %v1041, 0.0
      %v1354 = vmax.f32 %v1043, 0.0
      %v1355 = vmax.f32 %v1084, 0.0
      %v1356 = vmax.f32 %v1086, 0.0
      %v1357 = vmax.f32 %v1127, 0.0
      %v1358 = vmax.f32 %v1129, 0.0
      %v1359 = vmax.f32 %v1170, 0.0
      %v1360 = vmax.f32 %v1172, 0.0
      %v1361 = vmax.f32 %v1213, 0.0
      %v1362 = vmax.f32 %v1215, 0.0
      %v1363 = vmax.f32 %v1256, 0.0
      %v1364 = vmax.f32 %v1258, 0.0
      %v1365 = vmax.f32 %v1299, 0.0
      %v1366 = vmax.f32 %v1301, 0.0
      %v1367 = vmax.f32 %v1303, %v1311
      %v1368 = vmax.f32 %v1304, %v1312
      %v1369 = vmax.f32 %v1305, %v1313
      %v1370 = vmax.f32 %v1306, %v1314
      %v1371 = vmax.f32 %v1307, %v1315
      %v1372 = vmax.f32 %v1308, %v1316
      %v1373 = vmax.f32 %v1309, %v1317
      %v1374 = vmax.f32 %v1310, %v1318
      %v1375 = vmax.f32 %v1335, %v1343
      %v1376 = vmax.f32 %v1336, %v1344
      %v1377 = vmax.f32 %v1337, %v1345
      %v1378 = vmax.f32 %v1338, %v1346
      %v1379 = vmax.f32 %v1339, %v1347
      %v1380 = vmax.f32 %v1340, %v1348
      %v1381 = vmax.f32 %v1341, %v1349
      %v1382 = vmax.f32 %v1342, %v1350
      %v1383 = vmax.f32 %v1319, %v1327
      %v1384 = vmax.f32 %v1320, %v1328
      %v1385 = vmax.f32 %v1321, %v1329
      %v1386 = vmax.f32 %v1322, %v1330
      %v1387 = vmax.f32 %v1323, %v1331
      %v1388 = vmax.f32 %v1324, %v1332
      %v1389 = vmax.f32 %v1325, %v1333
      %v1390 = vmax.f32 %v1326, %v1334
      %v1391 = vmax.f32 %v1351, %v1359
      %v1392 = vmax.f32 %v1352, %v1360
      %v1393 = vmax.f32 %v1353, %v1361
      %v1394 = vmax.f32 %v1354, %v1362
      %v1395 = vmax.f32 %v1355, %v1363
      %v1396 = vmax.f32 %v1356, %v1364
      %v1397 = vmax.f32 %v1357, %v1365
      %v1398 = vmax.f32 %v1358, %v1366
      %v1399 = vmax.f32 %v1367, %v1383
      %v1400 = vmax.f32 %v1368, %v1384
      %v1401 = vmax.f32 %v1369, %v1385
      %v1402 = vmax.f32 %v1370, %v1386
      %v1403 = vmax.f32 %v1371, %v1387
      %v1404 = vmax.f32 %v1372, %v1388
      %v1405 = vmax.f32 %v1373, %v1389
      %v1406 = vmax.f32 %v1374, %v1390
      %v1407 = vmax.f32 %v1375, %v1391
      %v1408 = vmax.f32 %v1376, %v1392
      %v1409 = vmax.f32 %v1377, %v1393
      %v1410 = vmax.f32 %v1378, %v1394
      %v1411 = vmax.f32 %v1379, %v1395
      %v1412 = vmax.f32 %v1380, %v1396
      %v1413 = vmax.f32 %v1381, %v1397
      %v1414 = vmax.f32 %v1382, %v1398
      %v1415 = vpack.c.bf16 %v1407, %v1399
      %v1416 = vpack.c.bf16 %v1408, %v1400
      %v1417 = vpack.c.bf16 %v1409, %v1401
      %v1418 = vpack.c.bf16 %v1410, %v1402
      %v1419 = vpack.c.bf16 %v1411, %v1403
      %v1420 = vpack.c.bf16 %v1412, %v1404
      %v1421 = vpack.c.bf16 %v1413, %v1405
      %v1422 = vpack.c.bf16 %v1414, %v1406
      %v1431 = vunpack.c.l.b16 %v1415
      %v1432 = vunpack.c.l.b16 %v1416
      %v1433 = vunpack.c.l.b16 %v1417
      %v1434 = vunpack.c.l.b16 %v1418
      %v1435 = vunpack.c.l.b16 %v1419
      %v1436 = vunpack.c.l.b16 %v1420
      %v1437 = vunpack.c.l.b16 %v1421
      %v1438 = vunpack.c.l.b16 %v1422
      %v1439 = vunpack.c.h.b16 %v1415
      %v1440 = vunpack.c.h.b16 %v1416
      %v1441 = vunpack.c.h.b16 %v1417
      %v1442 = vunpack.c.h.b16 %v1418
      %v1443 = vunpack.c.h.b16 %v1419
      %v1444 = vunpack.c.h.b16 %v1420
      %v1445 = vunpack.c.h.b16 %v1421
      %v1446 = vunpack.c.h.b16 %v1422
      %v1447 = vpack.c.b16 %v1432, %v1431
      %v1448 = vpack.c.b16 %v1434, %v1433
      %v1449 = vpack.c.b16 %v1436, %v1435
      %v1450 = vpack.c.b16 %v1438, %v1437
      %v1451 = vpack.c.b16 %v1440, %v1439
      %v1452 = vpack.c.b16 %v1442, %v1441
      %v1453 = vpack.c.b16 %v1444, %v1443
      %v1454 = vpack.c.b16 %v1446, %v1445
      %1463 = vst [vmem:[%s206] sm:$0xff] %v1447
      %1464 = vst [vmem:[%s206 + $0x8] sm:$0xff] %v1448
      %1465 = vst [vmem:[%s206 + $0x10] sm:$0xff] %v1449
      %1466 = vst [vmem:[%s206 + $0x18] sm:$0xff] %v1450
      %1467 = vst [vmem:[%s206 + $0x20] sm:$0xff] %v1451
      %1468 = vst [vmem:[%s206 + $0x28] sm:$0xff] %v1452
      %1469 = vst [vmem:[%s206 + $0x30] sm:$0xff] %v1453
      %1470 = vst [vmem:[%s206 + $0x38] sm:$0xff] %v1454
      %p1471 = scmp.lt.s32.totalorder %s18, 1
      %s1472 = scalar_select %p1471, %s18, 1
      %p1473 = scmp.lt.s32.totalorder %s19, 3
      %s1474 = scalar_select %p1473, %s19, 3
      %s1475 = smul.addr %s1474, 16
      %s1476 = smul.addr %s1472, 64
      %s1477 = sadd.s32 %s1475, %s1476
      %s1478 = smul.addr %s1477, 4
      %s1479 = scalar_lea.vmem %s3, %s1478
      // Predicated region
      $region33: #{age_gender_net.2} parent=31 // pred_check
        %p1480 = pneg %p116
      $region34: #{age_gender_net.2} parent=31 // pred_check_branch
        %1482 = sbr.rel (%p1480) target = $region36
      $region35: #{age_gender_net.2} parent=31 // pred_region
        _
      $region36: #{age_gender_net.2} parent=31 // pred_fallthru
        _
    $region32: #{age_gender_net.2} parent=5 // pred_fallthru
      _
    %p1483 = scmp.le.s32.totalorder 2, %s9
    // Predicated region
    $region37: #{age_gender_net.2} parent=5 // pred_check
      %p1484 = pneg %p1483
    $region38: #{age_gender_net.2} parent=5 // pred_check_branch
      %1486 = sbr.rel (%p1484) target = $region40
    $region39: #{age_gender_net.2} parent=5 // pred_region
      %s1487 = ssub.s32 %s9, 2
      // Predicated region
      $region41: #{age_gender_net.2} parent=39 // pred_check
        %p1488 = pneg %p122
      $region42: #{age_gender_net.2} parent=39 // pred_check_branch
        %1490 = sbr.rel (%p1488) target = $region44
      $region43: #{age_gender_net.2} parent=39 // pred_region
        %p1491 = scmp.lt.s32.totalorder %s20, 1
        %s1492 = scalar_select %p1491, %s20, 1
        %p1493 = scmp.lt.s32.totalorder %s21, 3
        %s1494 = scalar_select %p1493, %s21, 3
        %s1495 = smul.addr %s1494, 16
        %s1496 = smul.addr %s1492, 64
        %s1497 = sadd.s32 %s1495, %s1496
        %s1498 = smul.addr %s1497, 4
        %s1499 = scalar_lea.vmem %s3, %s1498
      $region44: #{age_gender_net.2} parent=39 // pred_fallthru
        _
    $region40: #{age_gender_net.2} parent=5 // pred_fallthru
      _
  $region6: #{age_gender_net.2} parent=0 // loop_footer
    %s13 = sadd.s32 1, %s9
  $region7: #{age_gender_net.2} parent=0 // loop_footer_branch
    %8 = sbr.rel target = $region3
  $region8: #{age_gender_net.2} parent=0 // loop_exit
    _

// kernel: age_gender_net.3
$region0: #{age_gender_net.3}
  #allocation0 [shape = 'u32[]', space=smem, size = 0x4, offset = 0x4, fixed_abs, tag = 'smem constant byte address 0x4 - core index']
  #allocation1 [shape = 'u32[144,128]{1,0:T(1,128)}', space=vmem, size = 0x12000, scoped, tag = 'internal scratch']
  %s0 = inlined_call_operand.vmem [shape: bf16[2,4,144,1024], index: 0, kind: input, shape index: {}]
  %s1 = inlined_call_operand.vmem [shape: bf16[32,144], index: 1, kind: input, shape index: {}]
  %s2 = inlined_call_operand.vmem [shape: f32[32,1], index: 2, kind: input, shape index: {}]
  %s3 = inlined_call_operand.vmem [shape: f32[4,3,32,256], index: 3, kind: input, shape index: {}]
  %s4 = inlined_call_operand.vmem [shape: f32[3,1], index: 4, kind: input, shape index: {}]
  %s5 = inlined_call_operand.vmem [shape: f32[2,3,1], index: 5, kind: output, shape index: {}]
  %s6 = sld [smem:[#allocation0]]
  $region57: #{age_gender_net.3} parent=0
    _
  %s8 = ssub.s32 1, %s6
  %s9 = scalar_select 0, %s8, %s6
  loop: start=0, step=1, limit=10
  $region2: #{age_gender_net.3} parent=0 // loop_pre_header
    _
  $region3: #{age_gender_net.3} parent=0 // loop_header
    %s11 = sphi 0, %s15
    %p12 = scmp.ge.s32.totalorder %s11, 10
    %s18 = sphi 0, %s30
    %s19 = sphi 0, %s26
    %s20 = sphi 0, %s18
    %s21 = sphi 0, %s19
    %s22 = sphi 0, %s20
    %s23 = sphi 0, %s21
    %s35 = sphi 0, %s37
    %s38 = sphi 0, %s35
    %s39 = sphi 0, %s38
    %s55 = sphi 0, %s39
    %s59 = sphi 0, %s59
    %s61 = sphi 0, %s59
    %s62 = sphi 0, %s61
    %s76 = sphi 0, %s62
    %s80 = sphi 0, %s80
    %s82 = sphi 0, %s80
    %s83 = sphi 0, %s82
    %s97 = sphi 0, %s83
    %s103 = sphi 0, %s105
    %s106 = sphi 0, %s103
    %s107 = sphi 0, %s106
    %s123 = sphi 0, %s107
    %s127 = sphi 0, %s127
    %s129 = sphi 0, %s127
    %s130 = sphi 0, %s129
    %s144 = sphi 0, %s130
    %s150 = sphi 0, %s152
    %s153 = sphi 0, %s150
    %s154 = sphi 0, %s153
    %s170 = sphi 0, %s154
  $region4: #{age_gender_net.3} parent=0 // loop_header_branch
    %14 = sbr.rel (%p12) target = $region8
  $region5: #{age_gender_net.3} parent=0 // loop_body
    %s16 = ssub.s32 %s11, 1
    %s17 = ssub.s32 %s11, 2
    %s24 = sadd.s32 1, %s19
    %p25 = scmp.ge.s32.totalorder %s24, 4
    %s26 = scalar_select %p25, 0, %s24
    %s27 = sadd.s32 1, %s18
    %s28 = scalar_select %p25, %s27, %s18
    %p29 = scmp.ge.s32.totalorder %s28, 2
    %s30 = scalar_select %p29, 0, %s28
    %s31 = ssub.s32 %s18, %s30
    %s32 = ssub.s32 %s19, %s26
    %s33 = sor.u32 %s31, %s32
    %p34 = scmp.eq.s32.totalorder %s33, 0
    %s36 = sadd.s32 %s35, 1
    %s37 = scalar_select %p34, %s35, %s36
    %p40 = pneg %p34
    %p41 = scmp.eq.s32.totalorder %s11, 7
    %p42 = por %p40, %p41
    %p43 = scmp.ne.s32.totalorder %s35, %s38
    %p44 = scmp.eq.s32.totalorder %s11, 0
    %p45 = por %p43, %p44
    %p46 = scmp.ne.s32.totalorder %s35, %s38
    %p47 = scmp.eq.s32.totalorder %s16, 7
    %p48 = por %p46, %p47
    %p49 = scmp.ne.s32.totalorder %s38, %s39
    %p50 = scmp.eq.s32.totalorder %s16, 0
    %p51 = por %p49, %p50
    %p52 = scmp.ne.s32.totalorder %s38, %s39
    %p53 = scmp.eq.s32.totalorder %s17, 7
    %p54 = por %p52, %p53
    %p56 = scmp.ne.s32.totalorder %s39, %s55
    %p57 = scmp.eq.s32.totalorder %s17, 0
    %p58 = por %p56, %p57
    %s60 = sadd.s32 %s59, 1
    %p63 = scmp.eq.s32.totalorder %s11, 7
    %p64 = scmp.ne.s32.totalorder %s59, %s61
    %p65 = scmp.eq.s32.totalorder %s11, 0
    %p66 = por %p64, %p65
    %p67 = scmp.ne.s32.totalorder %s59, %s61
    %p68 = scmp.eq.s32.totalorder %s16, 7
    %p69 = por %p67, %p68
    %p70 = scmp.ne.s32.totalorder %s61, %s62
    %p71 = scmp.eq.s32.totalorder %s16, 0
    %p72 = por %p70, %p71
    %p73 = scmp.ne.s32.totalorder %s61, %s62
    %p74 = scmp.eq.s32.totalorder %s17, 7
    %p75 = por %p73, %p74
    %p77 = scmp.ne.s32.totalorder %s62, %s76
    %p78 = scmp.eq.s32.totalorder %s17, 0
    %p79 = por %p77, %p78
    %s81 = sadd.s32 %s80, 1
    %p84 = scmp.eq.s32.totalorder %s11, 7
    %p85 = scmp.ne.s32.totalorder %s80, %s82
    %p86 = scmp.eq.s32.totalorder %s11, 0
    %p87 = por %p85, %p86
    %p88 = scmp.ne.s32.totalorder %s80, %s82
    %p89 = scmp.eq.s32.totalorder %s16, 7
    %p90 = por %p88, %p89
    %p91 = scmp.ne.s32.totalorder %s82, %s83
    %p92 = scmp.eq.s32.totalorder %s16, 0
    %p93 = por %p91, %p92
    %p94 = scmp.ne.s32.totalorder %s82, %s83
    %p95 = scmp.eq.s32.totalorder %s17, 7
    %p96 = por %p94, %p95
    %p98 = scmp.ne.s32.totalorder %s83, %s97
    %p99 = scmp.eq.s32.totalorder %s17, 0
    %p100 = por %p98, %p99
    %s101 = ssub.s32 %s19, %s26
    %p102 = scmp.eq.s32.totalorder %s101, 0
    %s104 = sadd.s32 %s103, 1
    %s105 = scalar_select %p102, %s103, %s104
    %p108 = pneg %p102
    %p109 = scmp.eq.s32.totalorder %s11, 7
    %p110 = por %p108, %p109
    %p111 = scmp.ne.s32.totalorder %s103, %s106
    %p112 = scmp.eq.s32.totalorder %s11, 0
    %p113 = por %p111, %p112
    %p114 = scmp.ne.s32.totalorder %s103, %s106
    %p115 = scmp.eq.s32.totalorder %s16, 7
    %p116 = por %p114, %p115
    %p117 = scmp.ne.s32.totalorder %s106, %s107
    %p118 = scmp.eq.s32.totalorder %s16, 0
    %p119 = por %p117, %p118
    %p120 = scmp.ne.s32.totalorder %s106, %s107
    %p121 = scmp.eq.s32.totalorder %s17, 7
    %p122 = por %p120, %p121
    %p124 = scmp.ne.s32.totalorder %s107, %s123
    %p125 = scmp.eq.s32.totalorder %s17, 0
    %p126 = por %p124, %p125
    %s128 = sadd.s32 %s127, 1
    %p131 = scmp.eq.s32.totalorder %s11, 7
    %p132 = scmp.ne.s32.totalorder %s127, %s129
    %p133 = scmp.eq.s32.totalorder %s11, 0
    %p134 = por %p132, %p133
    %p135 = scmp.ne.s32.totalorder %s127, %s129
    %p136 = scmp.eq.s32.totalorder %s16, 7
    %p137 = por %p135, %p136
    %p138 = scmp.ne.s32.totalorder %s129, %s130
    %p139 = scmp.eq.s32.totalorder %s16, 0
    %p140 = por %p138, %p139
    %p141 = scmp.ne.s32.totalorder %s129, %s130
    %p142 = scmp.eq.s32.totalorder %s17, 7
    %p143 = por %p141, %p142
    %p145 = scmp.ne.s32.totalorder %s130, %s144
    %p146 = scmp.eq.s32.totalorder %s17, 0
    %p147 = por %p145, %p146
    %s148 = ssub.s32 %s18, %s30
    %p149 = scmp.eq.s32.totalorder %s148, 0
    %s151 = sadd.s32 %s150, 1
    %s152 = scalar_select %p149, %s150, %s151
    %p155 = pneg %p149
    %p156 = scmp.eq.s32.totalorder %s11, 7
    %p157 = por %p155, %p156
    %p158 = scmp.ne.s32.totalorder %s150, %s153
    %p159 = scmp.eq.s32.totalorder %s11, 0
    %p160 = por %p158, %p159
    %p161 = scmp.ne.s32.totalorder %s150, %s153
    %p162 = scmp.eq.s32.totalorder %s16, 7
    %p163 = por %p161, %p162
    %p164 = scmp.ne.s32.totalorder %s153, %s154
    %p165 = scmp.eq.s32.totalorder %s16, 0
    %p166 = por %p164, %p165
    %p167 = scmp.ne.s32.totalorder %s153, %s154
    %p168 = scmp.eq.s32.totalorder %s17, 7
    %p169 = por %p167, %p168
    %p171 = scmp.ne.s32.totalorder %s154, %s170
    %p172 = scmp.eq.s32.totalorder %s17, 0
    %p173 = por %p171, %p172
    %p174 = scmp.le.s32.totalorder 1, %s11
    %p175 = scmp.lt.s32.totalorder %s11, 9
    %p176 = pnand %p174, %p175
    %p177 = pneg %p176
    // Predicated region
    $region9: #{age_gender_net.3} parent=5 // pred_check
      _
    $region10: #{age_gender_net.3} parent=5 // pred_check_branch
      %179 = sbr.rel (%p176) target = $region12
    $region11: #{age_gender_net.3} parent=5 // pred_region
      %s180 = ssub.s32 %s11, 1
      // Predicated region
      $region13: #{age_gender_net.3} parent=11 // pred_check
        %p181 = pneg %p72
      $region14: #{age_gender_net.3} parent=11 // pred_check_branch
        %183 = sbr.rel (%p181) target = $region16
      $region15: #{age_gender_net.3} parent=11 // pred_region
        _
      $region16: #{age_gender_net.3} parent=11 // pred_fallthru
        _
      // Predicated region
      $region17: #{age_gender_net.3} parent=11 // pred_check
        %p184 = pneg %p93
      $region18: #{age_gender_net.3} parent=11 // pred_check_branch
        %186 = sbr.rel (%p184) target = $region20
      $region19: #{age_gender_net.3} parent=11 // pred_region
        _
      $region20: #{age_gender_net.3} parent=11 // pred_fallthru
        _
      // Predicated region
      $region21: #{age_gender_net.3} parent=11 // pred_check
        %p187 = pneg %p140
      $region22: #{age_gender_net.3} parent=11 // pred_check_branch
        %189 = sbr.rel (%p187) target = $region24
      $region23: #{age_gender_net.3} parent=11 // pred_region
        _
      $region24: #{age_gender_net.3} parent=11 // pred_fallthru
        _
    $region12: #{age_gender_net.3} parent=5 // pred_fallthru
      _
    %p190 = scmp.lt.s32.totalorder %s11, 8
    // Predicated region
    $region25: #{age_gender_net.3} parent=5 // pred_check
      %p191 = pneg %p190
    $region26: #{age_gender_net.3} parent=5 // pred_check_branch
      %193 = sbr.rel (%p191) target = $region28
    $region27: #{age_gender_net.3} parent=5 // pred_region
      // Predicated region
      $region29: #{age_gender_net.3} parent=27 // pred_check
        %p194 = pneg %p45
      $region30: #{age_gender_net.3} parent=27 // pred_check_branch
        %196 = sbr.rel (%p194) target = $region32
      $region31: #{age_gender_net.3} parent=27 // pred_region
        %p197 = scmp.lt.s32.totalorder %s18, 1
        %s198 = scalar_select %p197, %s18, 1
        %p199 = scmp.lt.s32.totalorder %s19, 3
        %s200 = scalar_select %p199, %s19, 3
        %s201 = smul.addr %s200, 144
        %s202 = smul.addr %s198, 576
        %s203 = sadd.s32 %s201, %s202
        %s204 = smul.addr %s203, 4
        %s205 = scalar_lea.vmem %s0, %s204
      $region32: #{age_gender_net.3} parent=27 // pred_fallthru
        _
      // Predicated region
      $region33: #{age_gender_net.3} parent=27 // pred_check
        %p206 = pneg %p113
      $region34: #{age_gender_net.3} parent=27 // pred_check_branch
        %208 = sbr.rel (%p206) target = $region36
      $region35: #{age_gender_net.3} parent=27 // pred_region
        %p209 = scmp.lt.s32.totalorder %s19, 3
        %s210 = scalar_select %p209, %s19, 3
        %s211 = smul.addr %s210, 24
        %s212 = smul.addr %s211, 8
        %s213 = scalar_lea.vmem %s3, %s212
      $region36: #{age_gender_net.3} parent=27 // pred_fallthru
        _
    $region28: #{age_gender_net.3} parent=5 // pred_fallthru
      _
    %p214 = scmp.le.s32.totalorder 1, %s11
    %p215 = scmp.lt.s32.totalorder %s11, 9
    %p216 = pnand %p214, %p215
    %p217 = pneg %p216
    // Predicated region
    $region37: #{age_gender_net.3} parent=5 // pred_check
      _
    $region38: #{age_gender_net.3} parent=5 // pred_check_branch
      %219 = sbr.rel (%p216) target = $region40
    $region39: #{age_gender_net.3} parent=5 // pred_region
      %s220 = ssub.s32 %s11, 1
      %p221 = scmp.lt.s32.totalorder %s20, 1
      %s222 = scalar_select %p221, %s20, 1
      %p223 = scmp.lt.s32.totalorder %s21, 3
      %s224 = scalar_select %p223, %s21, 3
      %s225 = smul.addr %s224, 144
      %s226 = smul.addr %s222, 576
      %s227 = sadd.s32 %s225, %s226
      %s228 = smul.addr %s227, 4
      %s229 = scalar_lea.vmem %s0, %s228
      %p230 = pneg %p51
      %p231 = pneg %p48
      %p232 = pneg %p72
      %p233 = pneg %p69
      %p234 = pneg %p93
      %p235 = pneg %p90
      %p236 = scmp.lt.s32.totalorder %s21, 3
      %s237 = scalar_select %p236, %s21, 3
      %s238 = smul.addr %s237, 24
      %s239 = smul.addr %s238, 8
      %s240 = scalar_lea.vmem %s3, %s239
      %p241 = pneg %p119
      %p242 = pneg %p116
      %p243 = pneg %p140
      %p244 = pneg %p137
      %p245 = pneg %p166
      %p246 = pneg %p163
      %p247 = scmp.lt.s32.totalorder %s20, 1
      %s248 = scalar_select %p247, %s20, 1
      %s249 = smul.addr %s248, 4
      %s250 = scalar_lea.vmem %s5, %s249
      %p251 = scmp.lt.s32.totalorder %s20, 1
      %s252 = scalar_select %p251, %s20, 1
      %p253 = scmp.lt.s32.totalorder %s21, 3
      %s254 = scalar_select %p253, %s21, 3
      %s255 = smul.addr %s254, 144
      %s256 = smul.addr %s252, 576
      %s257 = sadd.s32 %s255, %s256
      %s258 = smul.addr %s257, 4
      %s259 = scalar_lea.vmem %s0, %s258
      %p260 = scmp.lt.s32.totalorder %s21, 3
      %s261 = scalar_select %p260, %s21, 3
      %s262 = smul.addr %s261, 24
      %s263 = smul.addr %s262, 8
      %s264 = scalar_lea.vmem %s3, %s263
      %p265 = scmp.lt.s32.totalorder %s20, 1
      %s266 = scalar_select %p265, %s20, 1
      %s267 = smul.addr %s266, 4
      %s268 = scalar_lea.vmem %s5, %s267
      %v270 = vld [vmem:[%s1] sm:$0xff]
      %v271 = vld [vmem:[%s1 + $0x8] sm:$0xff]
      %v272 = vld [vmem:[%s1 + $0x10] sm:$0xff]
      %v273 = vld [vmem:[%s1 + $0x18] sm:$0xff]
      %v274 = vld [vmem:[%s259] sm:$0xff]
      %v275 = vld [vmem:[%s259 + $0x8] sm:$0xff]
      %v276 = vld [vmem:[%s259 + $0x10] sm:$0xff]
      %v277 = vld [vmem:[%s259 + $0x18] sm:$0xff]
      %v278 = vld [vmem:[%s259 + $0x20] sm:$0xff]
      %v279 = vld [vmem:[%s259 + $0x28] sm:$0xff]
      %v280 = vld [vmem:[%s259 + $0x30] sm:$0xff]
      %v281 = vld [vmem:[%s259 + $0x38] sm:$0xff]
      %v282 = vld [vmem:[%s259 + $0x40] sm:$0xff]
      %v283 = vld [vmem:[%s259 + $0x48] sm:$0xff]
      %v284 = vld [vmem:[%s259 + $0x50] sm:$0xff]
      %v285 = vld [vmem:[%s259 + $0x58] sm:$0xff]
      %v286 = vld [vmem:[%s259 + $0x60] sm:$0xff]
      %v287 = vld [vmem:[%s259 + $0x68] sm:$0xff]
      %v288 = vld [vmem:[%s259 + $0x70] sm:$0xff]
      %v289 = vld [vmem:[%s259 + $0x78] sm:$0xff]
      %v290 = vld [vmem:[%s259 + $0x80] sm:$0xff]
      %v291 = vld [vmem:[%s259 + $0x88] sm:$0xff]
      %v292 = vld [vmem:[%s259 + $0x90] sm:$0xff]
      %v293 = vld [vmem:[%s259 + $0x98] sm:$0xff]
      %v294 = vld [vmem:[%s259 + $0xa0] sm:$0xff]
      %v295 = vld [vmem:[%s259 + $0xa8] sm:$0xff]
      %v296 = vld [vmem:[%s259 + $0xb0] sm:$0xff]
      %v297 = vld [vmem:[%s259 + $0xb8] sm:$0xff]
      %v298 = vld [vmem:[%s259 + $0xc0] sm:$0xff]
      %v299 = vld [vmem:[%s259 + $0xc8] sm:$0xff]
      %v300 = vld [vmem:[%s259 + $0xd0] sm:$0xff]
      %v301 = vld [vmem:[%s259 + $0xd8] sm:$0xff]
      %v302 = vld [vmem:[%s259 + $0xe0] sm:$0xff]
      %v303 = vld [vmem:[%s259 + $0xe8] sm:$0xff]
      %v304 = vld [vmem:[%s259 + $0xf0] sm:$0xff]
      %v305 = vld [vmem:[%s259 + $0xf8] sm:$0xff]
      %v306 = vld [vmem:[%s259 + $0x100] sm:$0xff]
      %v307 = vld [vmem:[%s259 + $0x108] sm:$0xff]
      %v308 = vld [vmem:[%s259 + $0x110] sm:$0xff]
      %v309 = vld [vmem:[%s259 + $0x118] sm:$0xff]
      %v310 = vld [vmem:[%s259 + $0x120] sm:$0xff]
      %v311 = vld [vmem:[%s259 + $0x128] sm:$0xff]
      %v312 = vld [vmem:[%s259 + $0x130] sm:$0xff]
      %v313 = vld [vmem:[%s259 + $0x138] sm:$0xff]
      %v314 = vld [vmem:[%s259 + $0x140] sm:$0xff]
      %v315 = vld [vmem:[%s259 + $0x148] sm:$0xff]
      %v316 = vld [vmem:[%s259 + $0x150] sm:$0xff]
      %v317 = vld [vmem:[%s259 + $0x158] sm:$0xff]
      %v318 = vld [vmem:[%s259 + $0x160] sm:$0xff]
      %v319 = vld [vmem:[%s259 + $0x168] sm:$0xff]
      %v320 = vld [vmem:[%s259 + $0x170] sm:$0xff]
      %v321 = vld [vmem:[%s259 + $0x178] sm:$0xff]
      %v322 = vld [vmem:[%s259 + $0x180] sm:$0xff]
      %v323 = vld [vmem:[%s259 + $0x188] sm:$0xff]
      %v324 = vld [vmem:[%s259 + $0x190] sm:$0xff]
      %v325 = vld [vmem:[%s259 + $0x198] sm:$0xff]
      %v326 = vld [vmem:[%s259 + $0x1a0] sm:$0xff]
      %v327 = vld [vmem:[%s259 + $0x1a8] sm:$0xff]
      %v328 = vld [vmem:[%s259 + $0x1b0] sm:$0xff]
      %v329 = vld [vmem:[%s259 + $0x1b8] sm:$0xff]
      %v330 = vld [vmem:[%s259 + $0x1c0] sm:$0xff]
      %v331 = vld [vmem:[%s259 + $0x1c8] sm:$0xff]
      %v332 = vld [vmem:[%s259 + $0x1d0] sm:$0xff]
      %v333 = vld [vmem:[%s259 + $0x1d8] sm:$0xff]
      %v334 = vld [vmem:[%s259 + $0x1e0] sm:$0xff]
      %v335 = vld [vmem:[%s259 + $0x1e8] sm:$0xff]
      %v336 = vld [vmem:[%s259 + $0x1f0] sm:$0xff]
      %v337 = vld [vmem:[%s259 + $0x1f8] sm:$0xff]
      %v338 = vld [vmem:[%s259 + $0x200] sm:$0xff]
      %v339 = vld [vmem:[%s259 + $0x208] sm:$0xff]
      %v340 = vld [vmem:[%s259 + $0x210] sm:$0xff]
      %v341 = vld [vmem:[%s259 + $0x218] sm:$0xff]
      %v342 = vld [vmem:[%s259 + $0x220] sm:$0xff]
      %v343 = vld [vmem:[%s259 + $0x228] sm:$0xff]
      %v344 = vld [vmem:[%s259 + $0x230] sm:$0xff]
      %v345 = vld [vmem:[%s259 + $0x238] sm:$0xff]
      %v346 = vld [vmem:[%s2] sm:$0xff]
      %v347 = vld [vmem:[%s2 + $0x8] sm:$0xff]
      %v348 = vld [vmem:[%s2 + $0x10] sm:$0xff]
      %v349 = vld [vmem:[%s2 + $0x18] sm:$0xff]
      %351 = vset.pattern.permute.xlu0 0
      %352 = vperm.xlu0 %351, %v346
      %v353 = vpop.permute.xlu0 %352
      %356 = vset.pattern.permute.xlu0 0
      %357 = vperm.xlu0 %356, %v347
      %v358 = vpop.permute.xlu0 %357
      %361 = vset.pattern.permute.xlu0 0
      %362 = vperm.xlu0 %361, %v348
      %v363 = vpop.permute.xlu0 %362
      %366 = vset.pattern.permute.xlu0 0
      %367 = vperm.xlu0 %366, %v349
      %v368 = vpop.permute.xlu0 %367
      %v374 = vunpack.c.l.b16 %v270
      %v375 = vunpack.c.h.b16 %v270
      %v376 = vunpack.c.l.b16 %v271
      %v377 = vunpack.c.h.b16 %v271
      %v378 = vunpack.c.l.b16 %v272
      %v379 = vunpack.c.h.b16 %v272
      %v380 = vunpack.c.l.b16 %v273
      %v381 = vunpack.c.h.b16 %v273
      %v382 = vpack.c.b16 %v376, %v374
      %v383 = vpack.c.b16 %v377, %v375
      %v384 = vpack.c.b16 %v380, %v378
      %v385 = vpack.c.b16 %v381, %v379
      %v460 = vunpack.c.l.b16 %v274
      %v461 = vunpack.c.h.b16 %v274
      %v462 = vunpack.c.l.b16 %v275
      %v463 = vunpack.c.h.b16 %v275
      %v464 = vunpack.c.l.b16 %v276
      %v465 = vunpack.c.h.b16 %v276
      %v466 = vunpack.c.l.b16 %v277
      %v467 = vunpack.c.h.b16 %v277
      %v468 = vunpack.c.l.b16 %v278
      %v469 = vunpack.c.h.b16 %v278
      %v470 = vunpack.c.l.b16 %v279
      %v471 = vunpack.c.h.b16 %v279
      %v472 = vunpack.c.l.b16 %v280
      %v473 = vunpack.c.h.b16 %v280
      %v474 = vunpack.c.l.b16 %v281
      %v475 = vunpack.c.h.b16 %v281
      %v476 = vunpack.c.l.b16 %v282
      %v477 = vunpack.c.h.b16 %v282
      %v478 = vunpack.c.l.b16 %v283
      %v479 = vunpack.c.h.b16 %v283
      %v480 = vunpack.c.l.b16 %v284
      %v481 = vunpack.c.h.b16 %v284
      %v482 = vunpack.c.l.b16 %v285
      %v483 = vunpack.c.h.b16 %v285
      %v484 = vunpack.c.l.b16 %v286
      %v485 = vunpack.c.h.b16 %v286
      %v486 = vunpack.c.l.b16 %v287
      %v487 = vunpack.c.h.b16 %v287
      %v488 = vunpack.c.l.b16 %v288
      %v489 = vunpack.c.h.b16 %v288
      %v490 = vunpack.c.l.b16 %v289
      %v491 = vunpack.c.h.b16 %v289
      %v492 = vunpack.c.l.b16 %v290
      %v493 = vunpack.c.h.b16 %v290
      %v494 = vunpack.c.l.b16 %v291
      %v495 = vunpack.c.h.b16 %v291
      %v496 = vunpack.c.l.b16 %v292
      %v497 = vunpack.c.h.b16 %v292
      %v498 = vunpack.c.l.b16 %v293
      %v499 = vunpack.c.h.b16 %v293
      %v500 = vunpack.c.l.b16 %v294
      %v501 = vunpack.c.h.b16 %v294
      %v502 = vunpack.c.l.b16 %v295
      %v503 = vunpack.c.h.b16 %v295
      %v504 = vunpack.c.l.b16 %v296
      %v505 = vunpack.c.h.b16 %v296
      %v506 = vunpack.c.l.b16 %v297
      %v507 = vunpack.c.h.b16 %v297
      %v508 = vunpack.c.l.b16 %v298
      %v509 = vunpack.c.h.b16 %v298
      %v510 = vunpack.c.l.b16 %v299
      %v511 = vunpack.c.h.b16 %v299
      %v512 = vunpack.c.l.b16 %v300
      %v513 = vunpack.c.h.b16 %v300
      %v514 = vunpack.c.l.b16 %v301
      %v515 = vunpack.c.h.b16 %v301
      %v516 = vunpack.c.l.b16 %v302
      %v517 = vunpack.c.h.b16 %v302
      %v518 = vunpack.c.l.b16 %v303
      %v519 = vunpack.c.h.b16 %v303
      %v520 = vunpack.c.l.b16 %v304
      %v521 = vunpack.c.h.b16 %v304
      %v522 = vunpack.c.l.b16 %v305
      %v523 = vunpack.c.h.b16 %v305
      %v524 = vunpack.c.l.b16 %v306
      %v525 = vunpack.c.h.b16 %v306
      %v526 = vunpack.c.l.b16 %v307
      %v527 = vunpack.c.h.b16 %v307
      %v528 = vunpack.c.l.b16 %v308
      %v529 = vunpack.c.h.b16 %v308
      %v530 = vunpack.c.l.b16 %v309
      %v531 = vunpack.c.h.b16 %v309
      %v532 = vunpack.c.l.b16 %v310
      %v533 = vunpack.c.h.b16 %v310
      %v534 = vunpack.c.l.b16 %v311
      %v535 = vunpack.c.h.b16 %v311
      %v536 = vunpack.c.l.b16 %v312
      %v537 = vunpack.c.h.b16 %v312
      %v538 = vunpack.c.l.b16 %v313
      %v539 = vunpack.c.h.b16 %v313
      %v540 = vunpack.c.l.b16 %v314
      %v541 = vunpack.c.h.b16 %v314
      %v542 = vunpack.c.l.b16 %v315
      %v543 = vunpack.c.h.b16 %v315
      %v544 = vunpack.c.l.b16 %v316
      %v545 = vunpack.c.h.b16 %v316
      %v546 = vunpack.c.l.b16 %v317
      %v547 = vunpack.c.h.b16 %v317
      %v548 = vunpack.c.l.b16 %v318
      %v549 = vunpack.c.h.b16 %v318
      %v550 = vunpack.c.l.b16 %v319
      %v551 = vunpack.c.h.b16 %v319
      %v552 = vunpack.c.l.b16 %v320
      %v553 = vunpack.c.h.b16 %v320
      %v554 = vunpack.c.l.b16 %v321
      %v555 = vunpack.c.h.b16 %v321
      %v556 = vunpack.c.l.b16 %v322
      %v557 = vunpack.c.h.b16 %v322
      %v558 = vunpack.c.l.b16 %v323
      %v559 = vunpack.c.h.b16 %v323
      %v560 = vunpack.c.l.b16 %v324
      %v561 = vunpack.c.h.b16 %v324
      %v562 = vunpack.c.l.b16 %v325
      %v563 = vunpack.c.h.b16 %v325
      %v564 = vunpack.c.l.b16 %v326
      %v565 = vunpack.c.h.b16 %v326
      %v566 = vunpack.c.l.b16 %v327
      %v567 = vunpack.c.h.b16 %v327
      %v568 = vunpack.c.l.b16 %v328
      %v569 = vunpack.c.h.b16 %v328
      %v570 = vunpack.c.l.b16 %v329
      %v571 = vunpack.c.h.b16 %v329
      %v572 = vunpack.c.l.b16 %v330
      %v573 = vunpack.c.h.b16 %v330
      %v574 = vunpack.c.l.b16 %v331
      %v575 = vunpack.c.h.b16 %v331
      %v576 = vunpack.c.l.b16 %v332
      %v577 = vunpack.c.h.b16 %v332
      %v578 = vunpack.c.l.b16 %v333
      %v579 = vunpack.c.h.b16 %v333
      %v580 = vunpack.c.l.b16 %v334
      %v581 = vunpack.c.h.b16 %v334
      %v582 = vunpack.c.l.b16 %v335
      %v583 = vunpack.c.h.b16 %v335
      %v584 = vunpack.c.l.b16 %v336
      %v585 = vunpack.c.h.b16 %v336
      %v586 = vunpack.c.l.b16 %v337
      %v587 = vunpack.c.h.b16 %v337
      %v588 = vunpack.c.l.b16 %v338
      %v589 = vunpack.c.h.b16 %v338
      %v590 = vunpack.c.l.b16 %v339
      %v591 = vunpack.c.h.b16 %v339
      %v592 = vunpack.c.l.b16 %v340
      %v593 = vunpack.c.h.b16 %v340
      %v594 = vunpack.c.l.b16 %v341
      %v595 = vunpack.c.h.b16 %v341
      %v596 = vunpack.c.l.b16 %v342
      %v597 = vunpack.c.h.b16 %v342
      %v598 = vunpack.c.l.b16 %v343
      %v599 = vunpack.c.h.b16 %v343
      %v600 = vunpack.c.l.b16 %v344
      %v601 = vunpack.c.h.b16 %v344
      %v602 = vunpack.c.l.b16 %v345
      %v603 = vunpack.c.h.b16 %v345
      %v604 = vpack.c.b16 %v468, %v460
      %v605 = vpack.c.b16 %v469, %v461
      %v606 = vpack.c.b16 %v470, %v462
      %v607 = vpack.c.b16 %v471, %v463
      %v608 = vpack.c.b16 %v472, %v464
      %v609 = vpack.c.b16 %v473, %v465
      %v610 = vpack.c.b16 %v474, %v466
      %v611 = vpack.c.b16 %v475, %v467
      %v612 = vpack.c.b16 %v484, %v476
      %v613 = vpack.c.b16 %v485, %v477
      %v614 = vpack.c.b16 %v486, %v478
      %v615 = vpack.c.b16 %v487, %v479
      %v616 = vpack.c.b16 %v488, %v480
      %v617 = vpack.c.b16 %v489, %v481
      %v618 = vpack.c.b16 %v490, %v482
      %v619 = vpack.c.b16 %v491, %v483
      %v620 = vpack.c.b16 %v500, %v492
      %v621 = vpack.c.b16 %v501, %v493
      %v622 = vpack.c.b16 %v502, %v494
      %v623 = vpack.c.b16 %v503, %v495
      %v624 = vpack.c.b16 %v504, %v496
      %v625 = vpack.c.b16 %v505, %v497
      %v626 = vpack.c.b16 %v506, %v498
      %v627 = vpack.c.b16 %v507, %v499
      %v628 = vpack.c.b16 %v516, %v508
      %v629 = vpack.c.b16 %v517, %v509
      %v630 = vpack.c.b16 %v518, %v510
      %v631 = vpack.c.b16 %v519, %v511
      %v632 = vpack.c.b16 %v520, %v512
      %v633 = vpack.c.b16 %v521, %v513
      %v634 = vpack.c.b16 %v522, %v514
      %v635 = vpack.c.b16 %v523, %v515
      %v636 = vpack.c.b16 %v532, %v524
      %v637 = vpack.c.b16 %v533, %v525
      %v638 = vpack.c.b16 %v534, %v526
      %v639 = vpack.c.b16 %v535, %v527
      %v640 = vpack.c.b16 %v536, %v528
      %v641 = vpack.c.b16 %v537, %v529
      %v642 = vpack.c.b16 %v538, %v530
      %v643 = vpack.c.b16 %v539, %v531
      %v644 = vpack.c.b16 %v548, %v540
      %v645 = vpack.c.b16 %v549, %v541
      %v646 = vpack.c.b16 %v550, %v542
      %v647 = vpack.c.b16 %v551, %v543
      %v648 = vpack.c.b16 %v552, %v544
      %v649 = vpack.c.b16 %v553, %v545
      %v650 = vpack.c.b16 %v554, %v546
      %v651 = vpack.c.b16 %v555, %v547
      %v652 = vpack.c.b16 %v564, %v556
      %v653 = vpack.c.b16 %v565, %v557
      %v654 = vpack.c.b16 %v566, %v558
      %v655 = vpack.c.b16 %v567, %v559
      %v656 = vpack.c.b16 %v568, %v560
      %v657 = vpack.c.b16 %v569, %v561
      %v658 = vpack.c.b16 %v570, %v562
      %v659 = vpack.c.b16 %v571, %v563
      %v660 = vpack.c.b16 %v580, %v572
      %v661 = vpack.c.b16 %v581, %v573
      %v662 = vpack.c.b16 %v582, %v574
      %v663 = vpack.c.b16 %v583, %v575
      %v664 = vpack.c.b16 %v584, %v576
      %v665 = vpack.c.b16 %v585, %v577
      %v666 = vpack.c.b16 %v586, %v578
      %v667 = vpack.c.b16 %v587, %v579
      %v668 = vpack.c.b16 %v596, %v588
      %v669 = vpack.c.b16 %v597, %v589
      %v670 = vpack.c.b16 %v598, %v590
      %v671 = vpack.c.b16 %v599, %v591
      %v672 = vpack.c.b16 %v600, %v592
      %v673 = vpack.c.b16 %v601, %v593
      %v674 = vpack.c.b16 %v602, %v594
      %v675 = vpack.c.b16 %v603, %v595
      %vm748 = vcmask 130048
      %v750 = vsel %vm748, %v383, 0
      %v753 = vsel %vm748, %v385, 0
      %755 = vmatprep.subr.bf16.mxu0 %v661
      %756 = vmatpush1.bf16.msra.mxu0 %v660
      %757 = vmatprep.subr.bf16.mxu0 %v653
      %758 = vmatpush1.bf16.msra.mxu0 %v652
      %759 = vmatprep.subr.bf16.mxu0 %v645
      %760 = vmatpush1.bf16.msra.mxu0 %v644
      %761 = vmatprep.subr.bf16.mxu0 %v637
      %762 = vmatpush1.bf16.msra.mxu0 %v636
      %763 = vmatprep.subr.bf16.mxu0 %v629
      %764 = vmatpush1.bf16.msra.mxu0 %v628
      %765 = vmatprep.subr.bf16.mxu0 %v621
      %766 = vmatpush1.bf16.msra.mxu0 %v620
      %767 = vmatprep.subr.bf16.mxu0 %v613
      %768 = vmatpush1.bf16.msra.mxu0 %v612
      %769 = vmatprep.subr.bf16.mxu0 %v605
      %770 = vmatpush1.bf16.msra.mxu0 %v604
      %771 = vmatprep.subr.bf16.mxu0 0
      %772 = vmatpush2.bf16.msra.mxu0 0
      %773 = vmatprep.subr.bf16.mxu0 0
      %774 = vmatpush2.bf16.msra.mxu0 0
      %775 = vmatprep.subr.bf16.mxu0 0
      %776 = vmatpush2.bf16.msra.mxu0 0
      %777 = vmatprep.subr.bf16.mxu0 0
      %778 = vmatpush2.bf16.msra.mxu0 0
      %779 = vmatprep.subr.bf16.mxu0 0
      %780 = vmatpush2.bf16.msra.mxu0 0
      %781 = vmatprep.subr.bf16.mxu0 0
      %782 = vmatpush2.bf16.msra.mxu0 0
      %783 = vmatprep.subr.bf16.mxu0 0
      %784 = vmatpush2.bf16.msra.mxu0 0
      %785 = vmatprep.subr.bf16.mxu0 %v669
      %786 = vmatpush2.bf16.msra.mxu0 %v668
      %787 = vmatprep.mubr.bf16.mxu0 %v750
      %788 = vmatmul.mubr.bf16.gmra.mxu0 %v382
      %v789 = vpop.f32.mrf.mxu0
      %v790 = vadd.f32 %v353, %v789
      %v791 = vpop.f32.mrf.mxu0
      %v792 = vadd.f32 %v353, %v791
      %v793 = vpop.f32.mrf.mxu0
      %v794 = vadd.f32 %v358, %v793
      %v795 = vpop.f32.mrf.mxu0
      %v796 = vadd.f32 %v358, %v795
      %797 = vmatprep.mubr.bf16.mxu0 %v753
      %798 = vmatmul.mubr.bf16.gmra.mxu0 %v384
      %v799 = vpop.f32.mrf.mxu0
      %v800 = vadd.f32 %v363, %v799
      %v801 = vpop.f32.mrf.mxu0
      %v802 = vadd.f32 %v363, %v801
      %v803 = vpop.f32.mrf.mxu0
      %v804 = vadd.f32 %v368, %v803
      %v805 = vpop.f32.mrf.mxu0
      %v806 = vadd.f32 %v368, %v805
      %807 = vdwg.mxu0
      %808 = vmatprep.subr.bf16.mxu0 %v663
      %809 = vmatpush1.bf16.msra.mxu0 %v662
      %810 = vmatprep.subr.bf16.mxu0 %v655
      %811 = vmatpush1.bf16.msra.mxu0 %v654
      %812 = vmatprep.subr.bf16.mxu0 %v647
      %813 = vmatpush1.bf16.msra.mxu0 %v646
      %814 = vmatprep.subr.bf16.mxu0 %v639
      %815 = vmatpush1.bf16.msra.mxu0 %v638
      %816 = vmatprep.subr.bf16.mxu0 %v631
      %817 = vmatpush1.bf16.msra.mxu0 %v630
      %818 = vmatprep.subr.bf16.mxu0 %v623
      %819 = vmatpush1.bf16.msra.mxu0 %v622
      %820 = vmatprep.subr.bf16.mxu0 %v615
      %821 = vmatpush1.bf16.msra.mxu0 %v614
      %822 = vmatprep.subr.bf16.mxu0 %v607
      %823 = vmatpush1.bf16.msra.mxu0 %v606
      %824 = vmatprep.subr.bf16.mxu0 0
      %825 = vmatpush2.bf16.msra.mxu0 0
      %826 = vmatprep.subr.bf16.mxu0 0
      %827 = vmatpush2.bf16.msra.mxu0 0
      %828 = vmatprep.subr.bf16.mxu0 0
      %829 = vmatpush2.bf16.msra.mxu0 0
      %830 = vmatprep.subr.bf16.mxu0 0
      %831 = vmatpush2.bf16.msra.mxu0 0
      %832 = vmatprep.subr.bf16.mxu0 0
      %833 = vmatpush2.bf16.msra.mxu0 0
      %834 = vmatprep.subr.bf16.mxu0 0
      %835 = vmatpush2.bf16.msra.mxu0 0
      %836 = vmatprep.subr.bf16.mxu0 0
      %837 = vmatpush2.bf16.msra.mxu0 0
      %838 = vmatprep.subr.bf16.mxu0 %v671
      %839 = vmatpush2.bf16.msra.mxu0 %v670
      %840 = vmatprep.mubr.bf16.mxu0 %v750
      %841 = vmatmul.mubr.bf16.gmra.mxu0 %v382
      %v842 = vpop.f32.mrf.mxu0
      %v843 = vadd.f32 %v353, %v842
      %v844 = vpop.f32.mrf.mxu0
      %v845 = vadd.f32 %v353, %v844
      %v846 = vpop.f32.mrf.mxu0
      %v847 = vadd.f32 %v358, %v846
      %v848 = vpop.f32.mrf.mxu0
      %v849 = vadd.f32 %v358, %v848
      %850 = vmatprep.mubr.bf16.mxu0 %v753
      %851 = vmatmul.mubr.bf16.gmra.mxu0 %v384
      %v852 = vpop.f32.mrf.mxu0
      %v853 = vadd.f32 %v363, %v852
      %v854 = vpop.f32.mrf.mxu0
      %v855 = vadd.f32 %v363, %v854
      %v856 = vpop.f32.mrf.mxu0
      %v857 = vadd.f32 %v368, %v856
      %v858 = vpop.f32.mrf.mxu0
      %v859 = vadd.f32 %v368, %v858
      %860 = vdwg.mxu0
      %861 = vmatprep.subr.bf16.mxu0 %v665
      %862 = vmatpush1.bf16.msra.mxu0 %v664
      %863 = vmatprep.subr.bf16.mxu0 %v657
      %864 = vmatpush1.bf16.msra.mxu0 %v656
      %865 = vmatprep.subr.bf16.mxu0 %v649
      %866 = vmatpush1.bf16.msra.mxu0 %v648
      %867 = vmatprep.subr.bf16.mxu0 %v641
      %868 = vmatpush1.bf16.msra.mxu0 %v640
      %869 = vmatprep.subr.bf16.mxu0 %v633
      %870 = vmatpush1.bf16.msra.mxu0 %v632
      %871 = vmatprep.subr.bf16.mxu0 %v625
      %872 = vmatpush1.bf16.msra.mxu0 %v624
      %873 = vmatprep.subr.bf16.mxu0 %v617
      %874 = vmatpush1.bf16.msra.mxu0 %v616
      %875 = vmatprep.subr.bf16.mxu0 %v609
      %876 = vmatpush1.bf16.msra.mxu0 %v608
      %877 = vmatprep.subr.bf16.mxu0 0
      %878 = vmatpush2.bf16.msra.mxu0 0
      %879 = vmatprep.subr.bf16.mxu0 0
      %880 = vmatpush2.bf16.msra.mxu0 0
      %881 = vmatprep.subr.bf16.mxu0 0
      %882 = vmatpush2.bf16.msra.mxu0 0
      %883 = vmatprep.subr.bf16.mxu0 0
      %884 = vmatpush2.bf16.msra.mxu0 0
      %885 = vmatprep.subr.bf16.mxu0 0
      %886 = vmatpush2.bf16.msra.mxu0 0
      %887 = vmatprep.subr.bf16.mxu0 0
      %888 = vmatpush2.bf16.msra.mxu0 0
      %889 = vmatprep.subr.bf16.mxu0 0
      %890 = vmatpush2.bf16.msra.mxu0 0
      %891 = vmatprep.subr.bf16.mxu0 %v673
      %892 = vmatpush2.bf16.msra.mxu0 %v672
      %893 = vmatprep.mubr.bf16.mxu0 %v750
      %894 = vmatmul.mubr.bf16.gmra.mxu0 %v382
      %v895 = vpop.f32.mrf.mxu0
      %v896 = vadd.f32 %v353, %v895
      %v897 = vpop.f32.mrf.mxu0
      %v898 = vadd.f32 %v353, %v897
      %v899 = vpop.f32.mrf.mxu0
      %v900 = vadd.f32 %v358, %v899
      %v901 = vpop.f32.mrf.mxu0
      %v902 = vadd.f32 %v358, %v901
      %903 = vmatprep.mubr.bf16.mxu0 %v753
      %904 = vmatmul.mubr.bf16.gmra.mxu0 %v384
      %v905 = vpop.f32.mrf.mxu0
      %v906 = vadd.f32 %v363, %v905
      %v907 = vpop.f32.mrf.mxu0
      %v908 = vadd.f32 %v363, %v907
      %v909 = vpop.f32.mrf.mxu0
      %v910 = vadd.f32 %v368, %v909
      %v911 = vpop.f32.mrf.mxu0
      %v912 = vadd.f32 %v368, %v911
      %913 = vdwg.mxu0
      %914 = vmatprep.subr.bf16.mxu0 %v667
      %915 = vmatpush1.bf16.msra.mxu0 %v666
      %916 = vmatprep.subr.bf16.mxu0 %v659
      %917 = vmatpush1.bf16.msra.mxu0 %v658
      %918 = vmatprep.subr.bf16.mxu0 %v651
      %919 = vmatpush1.bf16.msra.mxu0 %v650
      %920 = vmatprep.subr.bf16.mxu0 %v643
      %921 = vmatpush1.bf16.msra.mxu0 %v642
      %922 = vmatprep.subr.bf16.mxu0 %v635
      %923 = vmatpush1.bf16.msra.mxu0 %v634
      %924 = vmatprep.subr.bf16.mxu0 %v627
      %925 = vmatpush1.bf16.msra.mxu0 %v626
      %926 = vmatprep.subr.bf16.mxu0 %v619
      %927 = vmatpush1.bf16.msra.mxu0 %v618
      %928 = vmatprep.subr.bf16.mxu0 %v611
      %929 = vmatpush1.bf16.msra.mxu0 %v610
      %930 = vmatprep.subr.bf16.mxu0 0
      %931 = vmatpush2.bf16.msra.mxu0 0
      %932 = vmatprep.subr.bf16.mxu0 0
      %933 = vmatpush2.bf16.msra.mxu0 0
      %934 = vmatprep.subr.bf16.mxu0 0
      %935 = vmatpush2.bf16.msra.mxu0 0
      %936 = vmatprep.subr.bf16.mxu0 0
      %937 = vmatpush2.bf16.msra.mxu0 0
      %938 = vmatprep.subr.bf16.mxu0 0
      %939 = vmatpush2.bf16.msra.mxu0 0
      %940 = vmatprep.subr.bf16.mxu0 0
      %941 = vmatpush2.bf16.msra.mxu0 0
      %942 = vmatprep.subr.bf16.mxu0 0
      %943 = vmatpush2.bf16.msra.mxu0 0
      %944 = vmatprep.subr.bf16.mxu0 %v675
      %945 = vmatpush2.bf16.msra.mxu0 %v674
      %946 = vmatprep.mubr.bf16.mxu0 %v750
      %947 = vmatmul.mubr.bf16.gmra.mxu0 %v382
      %v948 = vpop.f32.mrf.mxu0
      %v949 = vadd.f32 %v353, %v948
      %v950 = vpop.f32.mrf.mxu0
      %v951 = vadd.f32 %v353, %v950
      %v952 = vpop.f32.mrf.mxu0
      %v953 = vadd.f32 %v358, %v952
      %v954 = vpop.f32.mrf.mxu0
      %v955 = vadd.f32 %v358, %v954
      %956 = vmatprep.mubr.bf16.mxu0 %v753
      %957 = vmatmul.mubr.bf16.gmra.mxu0 %v384
      %v958 = vpop.f32.mrf.mxu0
      %v959 = vadd.f32 %v363, %v958
      %v960 = vpop.f32.mrf.mxu0
      %v961 = vadd.f32 %v363, %v960
      %v962 = vpop.f32.mrf.mxu0
      %v963 = vadd.f32 %v368, %v962
      %v964 = vpop.f32.mrf.mxu0
      %v965 = vadd.f32 %v368, %v964
      %966 = vdwg.mxu0
      %v967 = vmax.f32 %v790, 0.0
      %v968 = vmax.f32 %v792, 0.0
      %v969 = vmax.f32 %v843, 0.0
      %v970 = vmax.f32 %v845, 0.0
      %v971 = vmax.f32 %v896, 0.0
      %v972 = vmax.f32 %v898, 0.0
      %v973 = vmax.f32 %v949, 0.0
      %v974 = vmax.f32 %v951, 0.0
      %v975 = vmax.f32 %v794, 0.0
      %v976 = vmax.f32 %v796, 0.0
      %v977 = vmax.f32 %v847, 0.0
      %v978 = vmax.f32 %v849, 0.0
      %v979 = vmax.f32 %v900, 0.0
      %v980 = vmax.f32 %v902, 0.0
      %v981 = vmax.f32 %v953, 0.0
      %v982 = vmax.f32 %v955, 0.0
      %v983 = vmax.f32 %v800, 0.0
      %v984 = vmax.f32 %v802, 0.0
      %v985 = vmax.f32 %v853, 0.0
      %v986 = vmax.f32 %v855, 0.0
      %v987 = vmax.f32 %v906, 0.0
      %v988 = vmax.f32 %v908, 0.0
      %v989 = vmax.f32 %v959, 0.0
      %v990 = vmax.f32 %v961, 0.0
      %v991 = vmax.f32 %v804, 0.0
      %v992 = vmax.f32 %v806, 0.0
      %v993 = vmax.f32 %v857, 0.0
      %v994 = vmax.f32 %v859, 0.0
      %v995 = vmax.f32 %v910, 0.0
      %v996 = vmax.f32 %v912, 0.0
      %v997 = vmax.f32 %v963, 0.0
      %v998 = vmax.f32 %v965, 0.0
      %v999 = vmax.f32 %v967, %v969
      %v1000 = vmax.f32 %v968, %v970
      %v1001 = vmax.f32 %v975, %v977
      %v1002 = vmax.f32 %v976, %v978
      %v1003 = vmax.f32 %v983, %v985
      %v1004 = vmax.f32 %v984, %v986
      %v1005 = vmax.f32 %v991, %v993
      %v1006 = vmax.f32 %v992, %v994
      %v1007 = vmax.f32 %v971, %v973
      %v1008 = vmax.f32 %v972, %v974
      %v1009 = vmax.f32 %v979, %v981
      %v1010 = vmax.f32 %v980, %v982
      %v1011 = vmax.f32 %v987, %v989
      %v1012 = vmax.f32 %v988, %v990
      %v1013 = vmax.f32 %v995, %v997
      %v1014 = vmax.f32 %v996, %v998
      %v1015 = vmax.f32 %v999, %v1007
      %v1016 = vmax.f32 %v1000, %v1008
      %v1017 = vmax.f32 %v1001, %v1009
      %v1018 = vmax.f32 %v1002, %v1010
      %v1019 = vmax.f32 %v1003, %v1011
      %v1020 = vmax.f32 %v1004, %v1012
      %v1021 = vmax.f32 %v1005, %v1013
      %v1022 = vmax.f32 %v1006, %v1014
      %v1023 = vld [vmem:[%s264] sm:$0xff]
      %v1024 = vld [vmem:[%s264 + $0x8] sm:$0xff]
      %v1025 = vld [vmem:[%s264 + $0x10] sm:$0xff]
      %v1026 = vld [vmem:[%s264 + $0x18] sm:$0xff]
      %v1027 = vld [vmem:[%s264 + $0x20] sm:$0xff]
      %v1028 = vld [vmem:[%s264 + $0x28] sm:$0xff]
      %v1029 = vld [vmem:[%s264 + $0x30] sm:$0xff]
      %v1030 = vld [vmem:[%s264 + $0x38] sm:$0xff]
      %v1031 = vld [vmem:[%s264 + $0x40] sm:$0xff]
      %v1032 = vld [vmem:[%s264 + $0x48] sm:$0xff]
      %v1033 = vld [vmem:[%s264 + $0x50] sm:$0xff]
      %v1034 = vld [vmem:[%s264 + $0x58] sm:$0xff]
      %v1035 = vld [vmem:[%s264 + $0x60] sm:$0xff]
      %v1036 = vld [vmem:[%s264 + $0x68] sm:$0xff]
      %v1037 = vld [vmem:[%s264 + $0x70] sm:$0xff]
      %v1038 = vld [vmem:[%s264 + $0x78] sm:$0xff]
      %v1039 = vld [vmem:[%s264 + $0x80] sm:$0xff]
      %v1040 = vld [vmem:[%s264 + $0x88] sm:$0xff]
      %v1041 = vld [vmem:[%s264 + $0x90] sm:$0xff]
      %v1042 = vld [vmem:[%s264 + $0x98] sm:$0xff]
      %v1043 = vld [vmem:[%s264 + $0xa0] sm:$0xff]
      %v1044 = vld [vmem:[%s264 + $0xa8] sm:$0xff]
      %v1045 = vld [vmem:[%s264 + $0xb0] sm:$0xff]
      %v1046 = vld [vmem:[%s264 + $0xb8] sm:$0xff]
      %v1047 = vmul.f32 %v1023, %v1015
      %v1048 = vmul.f32 %v1024, %v1016
      %v1049 = vmul.f32 %v1025, %v1017
      %v1050 = vmul.f32 %v1026, %v1018
      %v1051 = vmul.f32 %v1027, %v1019
      %v1052 = vmul.f32 %v1028, %v1020
      %v1053 = vmul.f32 %v1029, %v1021
      %v1054 = vmul.f32 %v1030, %v1022
      %v1055 = vmul.f32 %v1031, %v1015
      %v1056 = vmul.f32 %v1032, %v1016
      %v1057 = vmul.f32 %v1033, %v1017
      %v1058 = vmul.f32 %v1034, %v1018
      %v1059 = vmul.f32 %v1035, %v1019
      %v1060 = vmul.f32 %v1036, %v1020
      %v1061 = vmul.f32 %v1037, %v1021
      %v1062 = vmul.f32 %v1038, %v1022
      %v1063 = vmul.f32 %v1039, %v1015
      %v1064 = vmul.f32 %v1040, %v1016
      %v1065 = vmul.f32 %v1041, %v1017
      %v1066 = vmul.f32 %v1042, %v1018
      %v1067 = vmul.f32 %v1043, %v1019
      %v1068 = vmul.f32 %v1044, %v1020
      %v1069 = vmul.f32 %v1045, %v1021
      %v1070 = vmul.f32 %v1046, %v1022
      %v1071 = vadd.f32 %v1047, %v1048
      %1072 = vadd.xlane.f32.xlu0 %v1071
      %v1073 = vpop.xlane.xlu0 %1072
      %v1074 = vadd.f32 %v1049, %v1050
      %1075 = vadd.xlane.f32.xlu0 %v1074
      %v1076 = vpop.xlane.xlu0 %1075
      %v1077 = vadd.f32 %v1051, %v1052
      %1078 = vadd.xlane.f32.xlu0 %v1077
      %v1079 = vpop.xlane.xlu0 %1078
      %v1080 = vadd.f32 %v1053, %v1054
      %1081 = vadd.xlane.f32.xlu0 %v1080
      %v1082 = vpop.xlane.xlu0 %1081
      %v1083 = vadd.f32 %v1055, %v1056
      %1084 = vadd.xlane.f32.xlu0 %v1083
      %v1085 = vpop.xlane.xlu0 %1084
      %v1086 = vadd.f32 %v1057, %v1058
      %1087 = vadd.xlane.f32.xlu0 %v1086
      %v1088 = vpop.xlane.xlu0 %1087
      %v1089 = vadd.f32 %v1059, %v1060
      %1090 = vadd.xlane.f32.xlu0 %v1089
      %v1091 = vpop.xlane.xlu0 %1090
      %v1092 = vadd.f32 %v1061, %v1062
      %1093 = vadd.xlane.f32.xlu0 %v1092
      %v1094 = vpop.xlane.xlu0 %1093
      %v1095 = vadd.f32 %v1063, %v1064
      %1096 = vadd.xlane.f32.xlu0 %v1095
      %v1097 = vpop.xlane.xlu0 %1096
      %v1098 = vadd.f32 %v1065, %v1066
      %1099 = vadd.xlane.f32.xlu0 %v1098
      %v1100 = vpop.xlane.xlu0 %1099
      %v1101 = vadd.f32 %v1067, %v1068
      %1102 = vadd.xlane.f32.xlu0 %v1101
      %v1103 = vpop.xlane.xlu0 %1102
      %v1104 = vadd.f32 %v1069, %v1070
      %1105 = vadd.xlane.f32.xlu0 %v1104
      %v1106 = vpop.xlane.xlu0 %1105
      %v1119 = vlaneseq
      %v1120 = vand.u32 %v1119, 127
      %v1121 = vlaneseq
      %v1122 = vshrl.u32 %v1121, 7
      %v1123 = vsub.s32 %v1120, %v1122
      %v1124 = vrot.slane %v1073, %v1123
      %v1125 = vadd.s32 %v1120, 4294967288
      %v1126 = vlaneseq
      %v1127 = vshrl.u32 %v1126, 7
      %v1128 = vsub.s32 %v1125, %v1127
      %v1129 = vrot.slane %v1076, %v1128
      %vm1130 = vcmask 130112
      %v1131 = vsel %vm1130, %v1129, %v1124
      %v1132 = vadd.s32 %v1120, 4294967280
      %v1133 = vlaneseq
      %v1134 = vshrl.u32 %v1133, 7
      %v1135 = vsub.s32 %v1132, %v1134
      %v1136 = vrot.slane %v1079, %v1135
      %vm1137 = vcmask 195712
      %v1138 = vsel %vm1137, %v1136, %v1131
      %v1139 = vadd.s32 %v1120, 4294967272
      %v1140 = vlaneseq
      %v1141 = vshrl.u32 %v1140, 7
      %v1142 = vsub.s32 %v1139, %v1141
      %v1143 = vrot.slane %v1082, %v1142
      %vm1144 = vcmask 261312
      %v1145 = vsel %vm1144, %v1143, %v1138
      %v1146 = vlaneseq
      %v1147 = vshrl.u32 %v1146, 7
      %v1148 = vsub.s32 %v1120, %v1147
      %v1149 = vrot.slane %v1085, %v1148
      %v1150 = vlaneseq
      %v1151 = vshrl.u32 %v1150, 7
      %v1152 = vsub.s32 %v1125, %v1151
      %v1153 = vrot.slane %v1088, %v1152
      %v1154 = vsel %vm1130, %v1153, %v1149
      %v1155 = vlaneseq
      %v1156 = vshrl.u32 %v1155, 7
      %v1157 = vsub.s32 %v1132, %v1156
      %v1158 = vrot.slane %v1091, %v1157
      %v1159 = vsel %vm1137, %v1158, %v1154
      %v1160 = vlaneseq
      %v1161 = vshrl.u32 %v1160, 7
      %v1162 = vsub.s32 %v1139, %v1161
      %v1163 = vrot.slane %v1094, %v1162
      %v1164 = vsel %vm1144, %v1163, %v1159
      %v1165 = vlaneseq
      %v1166 = vshrl.u32 %v1165, 7
      %v1167 = vsub.s32 %v1120, %v1166
      %v1168 = vrot.slane %v1097, %v1167
      %v1169 = vlaneseq
      %v1170 = vshrl.u32 %v1169, 7
      %v1171 = vsub.s32 %v1125, %v1170
      %v1172 = vrot.slane %v1100, %v1171
      %v1173 = vsel %vm1130, %v1172, %v1168
      %v1174 = vlaneseq
      %v1175 = vshrl.u32 %v1174, 7
      %v1176 = vsub.s32 %v1132, %v1175
      %v1177 = vrot.slane %v1103, %v1176
      %v1178 = vsel %vm1137, %v1177, %v1173
      %v1179 = vlaneseq
      %v1180 = vshrl.u32 %v1179, 7
      %v1181 = vsub.s32 %v1139, %v1180
      %v1182 = vrot.slane %v1106, %v1181
      %v1183 = vsel %vm1144, %v1182, %v1178
      %vm1184 = vcmask 1041409
      %v1185 = vsel %vm1184, %v1164, %v1145
      %vm1186 = vcmask 1042434
      %v1187 = vsel %vm1186, %v1183, %v1185
      %vm1189 = vcmask 256000
      %v1190 = vsel %vm1189, %v1187, 0.0
      %1191 = vadd.xlane.f32.xlu0 %v1190
      %v1192 = vpop.xlane.xlu0 %1191
      %p1193 = scmp.eq.s32.totalorder %s21, 0
      // Predicated region
      $region41: #{age_gender_net.3} parent=39 // pred_check
        %p1194 = pneg %p1193
      $region42: #{age_gender_net.3} parent=39 // pred_check_branch
        %1196 = sbr.rel (%p1194) target = $region44
      $region43: #{age_gender_net.3} parent=39 // pred_region
        %v1197 = vld [vmem:[%s4] sm:$0x7]
        %vm1198 = vcmask 2048
        %1199 = vst.msk [vmem:[%s268] sm:$0x7] %vm1198, %v1197
      $region44: #{age_gender_net.3} parent=39 // pred_fallthru
        _
      %v1200 = vld [vmem:[%s268] sm:$0x7]
      %v1201 = vadd.f32 %v1200, %v1192
      %vm1202 = vcmask 2048
      %1203 = vst.msk [vmem:[%s268] sm:$0x7] %vm1202, %v1201
      %p1204 = scmp.lt.s32.totalorder %s20, 1
      %s1205 = scalar_select %p1204, %s20, 1
      %s1206 = smul.addr %s1205, 4
      %s1207 = scalar_lea.vmem %s5, %s1206
      // Predicated region
      $region45: #{age_gender_net.3} parent=39 // pred_check
        %p1208 = pneg %p163
      $region46: #{age_gender_net.3} parent=39 // pred_check_branch
        %1210 = sbr.rel (%p1208) target = $region48
      $region47: #{age_gender_net.3} parent=39 // pred_region
        _
      $region48: #{age_gender_net.3} parent=39 // pred_fallthru
        _
    $region40: #{age_gender_net.3} parent=5 // pred_fallthru
      _
    %p1211 = scmp.le.s32.totalorder 2, %s11
    // Predicated region
    $region49: #{age_gender_net.3} parent=5 // pred_check
      %p1212 = pneg %p1211
    $region50: #{age_gender_net.3} parent=5 // pred_check_branch
      %1214 = sbr.rel (%p1212) target = $region52
    $region51: #{age_gender_net.3} parent=5 // pred_region
      %s1215 = ssub.s32 %s11, 2
      // Predicated region
      $region53: #{age_gender_net.3} parent=51 // pred_check
        %p1216 = pneg %p169
      $region54: #{age_gender_net.3} parent=51 // pred_check_branch
        %1218 = sbr.rel (%p1216) target = $region56
      $region55: #{age_gender_net.3} parent=51 // pred_region
        %p1219 = scmp.lt.s32.totalorder %s22, 1
        %s1220 = scalar_select %p1219, %s22, 1
        %s1221 = smul.addr %s1220, 4
        %s1222 = scalar_lea.vmem %s5, %s1221
      $region56: #{age_gender_net.3} parent=51 // pred_fallthru
        _
    $region52: #{age_gender_net.3} parent=5 // pred_fallthru
      _
  $region6: #{age_gender_net.3} parent=0 // loop_footer
    %s15 = sadd.s32 1, %s11
  $region7: #{age_gender_net.3} parent=0 // loop_footer_branch
    %10 = sbr.rel target = $region3
  $region8: #{age_gender_net.3} parent=0 // loop_exit
    _

</llo_original>
